<compile_context>
chip_gen: v7x
topology: tpu7x:2x2x1
jax: 0.10.0
libtpu: 0.0.40
codegen_flags: <defaults>
</compile_context>

<pallas_src>
import jax
import jax.numpy as jnp
from jax import lax
from jax.experimental import pallas as pl
from jax.experimental.pallas import tpu as pltpu

EPS = 1e-5


def _basic_block_kernel(x_ref, t1_ref, g1_ref, b1_ref, t2_ref, g2_ref, b2_ref,
                        f_ref, ft_ref, out_ref, pad_ref):
    # x_ref  : (N, H, W*C)       unpadded NHWC input, (W, C) flattened (lane-dense)
    # t*_ref : (3*W*C, W*C)      stacked block-Toeplitz conv weights (dy, dx and
    #                            W-boundary clipping folded into the K dim)
    # g*/b*  : (1, W*C)          BN gamma / beta, pre-tiled across the W groups
    # f_ref  : (W*C, C)          fold matrix  (columns -> per-channel sums)
    # ft_ref : (C, W*C)          broadcast matrix (per-channel -> columns)
    # out_ref: (N*H, W*C)        lane-dense output slab
    # pad_ref: (N, H+2, W*C)     H-halo padded scratch shared by both convs
    N, H, WC = x_ref.shape
    C = f_ref.shape[1]
    W = WC // C
    R = N * H                        # rows of the lane-dense slab
    inv_cnt = 1.0 / float(N * H * W)   # BN sample count per channel

    # ---- zero only the top/bottom halo rows (full-lane unmasked stores); ----
    # ---- they stay zero for both convs.                                  ----
    zrow = jnp.zeros((N, 1, WC), jnp.float32)
    pad_ref[:, 0:1, :] = zrow                 # top halo row
    pad_ref[:, H + 1:H + 2, :] = zrow         # bottom halo row

    def conv3x3(t_ref):
        # Single MXU matmul per conv: K = 3*W*C.  The three dy row-slabs are
        # concatenated along K; dx taps + W-boundary clipping live in the
        # stacked Toeplitz weights, so no per-tap im2col and no W padding.
        lhs = jnp.concatenate(
            [pad_ref[:, 0:H, :], pad_ref[:, 1:H + 1, :], pad_ref[:, 2:H + 2, :]],
            axis=-1).reshape(R, 3 * WC)
        return jnp.dot(lhs, t_ref[...], preferred_element_type=jnp.float32)

    def batchnorm(h, g_ref, b_ref):
        # Training-mode BN fused into one scale/shift FMA with one-pass f32
        # stats.  Both moments share ONE fold matmul; both channel broadcasts
        # share ONE bcast matmul.
        hh = jnp.concatenate([h, h * h], axis=0)                          # (2R, WC)
        s = jnp.dot(hh, f_ref[...], preferred_element_type=jnp.float32)   # (2R, C)
        s1 = jnp.sum(s[:R], axis=0, keepdims=True)                        # (1, C)
        s2 = jnp.sum(s[R:], axis=0, keepdims=True)                        # (1, C)
        mean = s1 * inv_cnt
        # NOTE: one-pass E[x^2]-E[x]^2 variance is fine at these magnitudes
        # (eps=1e-5); revisit if activations become large-mean.
        var = s2 * inv_cnt - mean * mean
        inv_std = lax.rsqrt(var + EPS)                                    # EUP
        stats = jnp.concatenate([inv_std, mean], axis=0)                  # (2, C)
        bc = jnp.dot(stats, ft_ref[...], preferred_element_type=jnp.float32)  # (2, WC)
        scale = bc[0:1, :] * g_ref[...]
        shift = b_ref[...] - bc[1:2, :] * scale
        return h * scale + shift

    # conv1 -> bn1 -> relu   (conv bias omitted: cancelled by BN mean subtract)
    pad_ref[:, 1:H + 1, :] = x_ref[...]            # lane-aligned unmasked store
    h1 = jnp.maximum(batchnorm(conv3x3(t1_ref), g1_ref, b1_ref), 0.0)

    # residual (lane-dense view of the untouched input ref)
    res = x_ref[...].reshape(R, WC)

    # reuse the same padded scratch for conv2 (top/bottom halo rows still zero)
    pad_ref[:, 1:H + 1, :] = h1.reshape(N, H, WC)
    h2 = batchnorm(conv3x3(t2_ref), g2_ref, b2_ref)

    # residual add + relu, lane-dense (16, 256) store
    out_ref[...] = jnp.maximum(h2 + res, 0.0)


def _toeplitz_conv_weights(w_oihw, W):
    """OIHW (Cout, Cin, 3, 3) -> (3*W*Cin, W*Cout) stacked block-Toeplitz matrix.

    T[dy*W*Cin + xi*Cin + ci, xo*Cout + co] = w[co, ci, dy, xi - xo + 1]
    for xi - xo + 1 in {0,1,2}; the W-direction zero padding is realized by NOT
    emitting out-of-range taps (boundary clipping baked into the weights), so
    the data side needs no W padding at all.
    """
    cout, cin, kh, kw = w_oihw.shape
    w_hwio = jnp.transpose(w_oihw, (2, 3, 1, 0))                  # (3, 3, Cin, Cout)
    xi = jnp.arange(W)[:, None]                                   # input pixel idx
    xo = jnp.arange(W)[None, :]                                   # output pixel idx
    dx = xi - xo + 1                                              # kernel col idx
    sel = (dx[:, :, None] == jnp.arange(kw)[None, None, :]).astype(w_oihw.dtype)
    t = jnp.einsum('xzd,ydio->yxizo', sel, w_hwio)                # (3, W, Cin, W, Cout)
    return t.reshape(kh * W * cin, W * cout)


def precompute_block_consts(params, W):
    """Parameter-dependent constants; hoist this out of the per-block hot path
    for a residual tower (call once per parameter set, not per forward)."""
    w1, _cb1, g1, be1, w2, _cb2, g2, be2 = params
    C = w1.shape[0]
    t1 = _toeplitz_conv_weights(w1.astype(jnp.float32), W)        # (3*W*C, W*C)
    t2 = _toeplitz_conv_weights(w2.astype(jnp.float32), W)
    # BN affine params pre-tiled to the (W*C) column layout.  Conv biases are
    # dropped: exactly cancelled by training-mode BN mean subtraction.
    g1t = jnp.tile(g1.reshape(1, C).astype(jnp.float32), (1, W))
    b1t = jnp.tile(be1.reshape(1, C).astype(jnp.float32), (1, W))
    g2t = jnp.tile(g2.reshape(1, C).astype(jnp.float32), (1, W))
    b2t = jnp.tile(be2.reshape(1, C).astype(jnp.float32), (1, W))
    # constant fold / broadcast matrices between (W*C) columns and C channels
    eye = jnp.eye(C, dtype=jnp.float32)
    fold = jnp.tile(eye, (W, 1))      # (W*C, C)
    bcast = jnp.tile(eye, (1, W))     # (C, W*C)
    return (t1, g1t, b1t, t2, g2t, b2t, fold, bcast)


def basic_block_lane_dense(x_lane, consts, *, N, H, W, C):
    """Lane-dense entry point: x_lane is (N, H, W*C) f32, returns (N*H, W*C).
    Use this to chain blocks in a tower without NCHW<->NHWC relayout."""
    t1, g1t, b1t, t2, g2t, b2t, fold, bcast = consts
    R, WC = N * H, W * C
    vmem = pl.BlockSpec(memory_space=pltpu.MemorySpace.VMEM)

    # Problem is tiny (~2 MiB resident incl. Toeplitz weights), so everything
    # lives in VMEM with a single kernel invocation (no grid).
    # TODO(synk): for batched selfplay (N in the hundreds) add a batch-tile grid
    # with dimension_semantics=("parallel",...), a cross-tile BN reduction (or
    # eval-mode BN), and vmem_limit_bytes sized per generation (64 MiB on v7x).
    return pl.pallas_call(
        _basic_block_kernel,
        out_shape=jax.ShapeDtypeStruct((R, WC), jnp.float32),
        in_specs=[vmem] * 9,
        out_specs=vmem,
        scratch_shapes=[pltpu.VMEM((N, H + 2, WC), jnp.float32)],
    )(x_lane, t1, g1t, b1t, t2, g2t, b2t, fold, bcast)


def basic_block_pallas(x_nchw, params):
    """x_nchw: (N, C, H, W) float32.  Returns (N, C, H, W) float32."""
    N, C, H, W = x_nchw.shape
    consts = precompute_block_consts(params, W)   # hoistable per parameter set

    # NCHW -> NHWC, flatten (W, C) into a lane-dense last dim.
    x_lane = jnp.transpose(x_nchw, (0, 2, 3, 1)).astype(jnp.float32).reshape(
        N, H, W * C)
    out2 = basic_block_lane_dense(x_lane, consts, N=N, H=H, W=W, C=C)
    return jnp.transpose(out2.reshape(N, H, W, C), (0, 3, 1, 2))


def basic_block_ref(x_nchw, params):
    """Plain-JAX reference (NCHW, includes conv biases) for correctness check."""
    w1, cb1, g1, be1, w2, cb2, g2, be2 = params

    def conv(x, w, b):
        y = lax.conv_general_dilated(
            x, w, window_strides=(1, 1), padding=((1, 1), (1, 1)),
            dimension_numbers=("NCHW", "OIHW", "NCHW"))
        return y + b[None, :, None, None]

    def bn(x, g, be):
        mean = jnp.mean(x, axis=(0, 2, 3), keepdims=True)
        var = jnp.mean((x - mean) ** 2, axis=(0, 2, 3), keepdims=True)
        return ((x - mean) * lax.rsqrt(var + EPS)
                * g[None, :, None, None] + be[None, :, None, None])

    h = jax.nn.relu(bn(conv(x_nchw, w1, cb1), g1, be1))
    h = bn(conv(h, w2, cb2), g2, be2)
    return jax.nn.relu(h + x_nchw)


def make_params(key, num_filters):
    """Deterministic synthetic parameters with PyTorch-module shapes."""
    ks = jax.random.split(key, 8)
    C = num_filters
    w1 = 0.1 * jax.random.normal(ks[0], (C, C, 3, 3), jnp.float32)   # conv1.weight (OIHW)
    cb1 = 0.1 * jax.random.normal(ks[1], (C,), jnp.float32)          # conv1.bias
    g1 = 1.0 + 0.1 * jax.random.normal(ks[2], (C,), jnp.float32)     # bn1.weight
    be1 = 0.1 * jax.random.normal(ks[3], (C,), jnp.float32)          # bn1.bias
    w2 = 0.1 * jax.random.normal(ks[4], (C, C, 3, 3), jnp.float32)   # conv2.weight
    cb2 = 0.1 * jax.random.normal(ks[5], (C,), jnp.float32)          # conv2.bias
    g2 = 1.0 + 0.1 * jax.random.normal(ks[6], (C,), jnp.float32)     # bn2.weight
    be2 = 0.1 * jax.random.normal(ks[7], (C,), jnp.float32)          # bn2.bias
    return (w1, cb1, g1, be1, w2, cb2, g2, be2)


if __name__ == "__main__":
    key = jax.random.PRNGKey(0)
    k_x, k_p = jax.random.split(key)

    N, C, H, W = 2, 32, 8, 8          # batch=2, num_filters=32, 8x8 Othello board
    x = jax.random.normal(k_x, (N, C, H, W), jnp.float32)
    params = make_params(k_p, C)

    out = jax.block_until_ready(basic_block_pallas(x, params))
    ref = jax.block_until_ready(basic_block_ref(x, params))

    assert out.shape == (N, C, H, W) and out.dtype == jnp.float32
    err = jnp.max(jnp.abs(out - ref))
    assert jnp.allclose(out, ref, rtol=1e-4, atol=1e-4), f"max abs err {err}"

    print("KERNEL_OK")
</pallas_src>

<mosaic_0001>
module attributes {stable_mosaic.version = 11 : i64} {
  func.func @_basic_block_kernel(%arg0: memref<2x8x256xf32, #tpu.memory_space<vmem>>, %arg1: memref<768x256xf32, #tpu.memory_space<vmem>>, %arg2: memref<1x256xf32, #tpu.memory_space<vmem>>, %arg3: memref<1x256xf32, #tpu.memory_space<vmem>>, %arg4: memref<768x256xf32, #tpu.memory_space<vmem>>, %arg5: memref<1x256xf32, #tpu.memory_space<vmem>>, %arg6: memref<1x256xf32, #tpu.memory_space<vmem>>, %arg7: memref<256x32xf32, #tpu.memory_space<vmem>>, %arg8: memref<32x256xf32, #tpu.memory_space<vmem>>, %arg9: memref<16x256xf32, #tpu.memory_space<vmem>>, %arg10: memref<2x10x256xf32, #tpu.memory_space<vmem>>) attributes {dimension_semantics = [], scalar_prefetch = 0 : i64, scratch_operands = 1 : i64, tpu.core_type = #tpu.core_type<tc>} {
    %cst = arith.constant 0.000000e+00 : f32
    %0 = vector.broadcast %cst : f32 to vector<2x1x256xf32>
    %c0 = arith.constant 0 : index
    %c0_0 = arith.constant 0 : index
    %c0_1 = arith.constant 0 : index
    %1 = vector.load %arg10[%c0, %c0_0, %c0_1] : memref<2x10x256xf32, #tpu.memory_space<vmem>>, vector<2x1x256xf32>
    tpu.vector_store %arg10[%c0, %c0_0, %c0_1], %0 {strides = array<i32>} : memref<2x10x256xf32, #tpu.memory_space<vmem>>, vector<2x1x256xf32>,
    %c0_2 = arith.constant 0 : index
    %c9 = arith.constant 9 : index
    %c0_3 = arith.constant 0 : index
    %2 = vector.load %arg10[%c0_2, %c9, %c0_3] : memref<2x10x256xf32, #tpu.memory_space<vmem>>, vector<2x1x256xf32>
    tpu.vector_store %arg10[%c0_2, %c9, %c0_3], %0 {strides = array<i32>} : memref<2x10x256xf32, #tpu.memory_space<vmem>>, vector<2x1x256xf32>,
    %c0_4 = arith.constant 0 : index
    %c0_5 = arith.constant 0 : index
    %c0_6 = arith.constant 0 : index
    %3 = vector.load %arg0[%c0_4, %c0_5, %c0_6] : memref<2x8x256xf32, #tpu.memory_space<vmem>>, vector<2x8x256xf32>
    %c0_7 = arith.constant 0 : index
    %c1 = arith.constant 1 : index
    %c0_8 = arith.constant 0 : index
    %4 = vector.load %arg10[%c0_7, %c1, %c0_8] : memref<2x10x256xf32, #tpu.memory_space<vmem>>, vector<2x8x256xf32>
    tpu.vector_store %arg10[%c0_7, %c1, %c0_8], %3 {strides = array<i32>} : memref<2x10x256xf32, #tpu.memory_space<vmem>>, vector<2x8x256xf32>,
    %c0_9 = arith.constant 0 : index
    %c0_10 = arith.constant 0 : index
    %c0_11 = arith.constant 0 : index
    %5 = vector.load %arg10[%c0_9, %c0_10, %c0_11] : memref<2x10x256xf32, #tpu.memory_space<vmem>>, vector<2x8x256xf32>
    %c0_12 = arith.constant 0 : index
    %c1_13 = arith.constant 1 : index
    %c0_14 = arith.constant 0 : index
    %6 = vector.load %arg10[%c0_12, %c1_13, %c0_14] : memref<2x10x256xf32, #tpu.memory_space<vmem>>, vector<2x8x256xf32>
    %c0_15 = arith.constant 0 : index
    %c2 = arith.constant 2 : index
    %c0_16 = arith.constant 0 : index
    %7 = vector.load %arg10[%c0_15, %c2, %c0_16] : memref<2x10x256xf32, #tpu.memory_space<vmem>>, vector<2x8x256xf32>
    %8 = tpu.concatenate %5, %6, %7 in 2 : vector<2x8x256xf32>, vector<2x8x256xf32>, vector<2x8x256xf32> -> vector<2x8x768xf32>
    %9 = vector.shape_cast %8 : vector<2x8x768xf32> to vector<16x768xf32>
    %c0_17 = arith.constant 0 : index
    %c0_18 = arith.constant 0 : index
    %10 = vector.load %arg1[%c0_17, %c0_18] : memref<768x256xf32, #tpu.memory_space<vmem>>, vector<768x256xf32>
    %cst_19 = arith.constant dense<0.000000e+00> : vector<16x256xf32>
    %11 = tpu.matmul %9, %10, %cst_19 {dimension_numbers = #tpu.dot_dimension_numbers<[1], [0], [0], [1], [0, 0, 1, 1], [], []>} : vector<16x768xf32>, vector<768x256xf32>, vector<16x256xf32> -> vector<16x256xf32>
    %12 = arith.mulf %11, %11 : vector<16x256xf32>
    %13 = tpu.concatenate %11, %12 in 0 : vector<16x256xf32>, vector<16x256xf32> -> vector<32x256xf32>
    %c0_20 = arith.constant 0 : index
    %c0_21 = arith.constant 0 : index
    %14 = vector.load %arg7[%c0_20, %c0_21] : memref<256x32xf32, #tpu.memory_space<vmem>>, vector<256x32xf32>
    %cst_22 = arith.constant dense<0.000000e+00> : vector<32x32xf32>
    %15 = tpu.matmul %13, %14, %cst_22 {dimension_numbers = #tpu.dot_dimension_numbers<[1], [0], [0], [1], [0, 0, 1, 1], [], []>} : vector<32x256xf32>, vector<256x32xf32>, vector<32x32xf32> -> vector<32x32xf32>
    %16 = vector.extract_strided_slice %15 {offsets = [0, 0], sizes = [16, 32], strides = [1, 1]} : vector<32x32xf32> to vector<16x32xf32>
    %cst_23 = arith.constant dense<0.000000e+00> : vector<32xf32>
    %17 = vector.multi_reduction <add>, %16, %cst_23 [0] : vector<16x32xf32> to vector<32xf32>
    %18 = vector.shape_cast %17 : vector<32xf32> to vector<1x32xf32>
    %19 = vector.extract_strided_slice %15 {offsets = [16, 0], sizes = [16, 32], strides = [1, 1]} : vector<32x32xf32> to vector<16x32xf32>
    %cst_24 = arith.constant dense<0.000000e+00> : vector<32xf32>
    %20 = vector.multi_reduction <add>, %19, %cst_24 [0] : vector<16x32xf32> to vector<32xf32>
    %21 = vector.shape_cast %20 : vector<32xf32> to vector<1x32xf32>
    %cst_25 = arith.constant 7.812500e-03 : f32
    %22 = vector.broadcast %cst_25 : f32 to vector<1x32xf32>
    %23 = arith.mulf %18, %22 : vector<1x32xf32>
    %cst_26 = arith.constant 7.812500e-03 : f32
    %24 = vector.broadcast %cst_26 : f32 to vector<1x32xf32>
    %25 = arith.mulf %21, %24 : vector<1x32xf32>
    %26 = arith.mulf %23, %23 : vector<1x32xf32>
    %27 = arith.subf %25, %26 : vector<1x32xf32>
    %cst_27 = arith.constant 9.99999974E-6 : f32
    %28 = vector.broadcast %cst_27 : f32 to vector<1x32xf32>
    %29 = arith.addf %27, %28 : vector<1x32xf32>
    %30 = math.rsqrt %29 : vector<1x32xf32>
    %31 = tpu.concatenate %30, %23 in 0 : vector<1x32xf32>, vector<1x32xf32> -> vector<2x32xf32>
    %c0_28 = arith.constant 0 : index
    %c0_29 = arith.constant 0 : index
    %32 = vector.load %arg8[%c0_28, %c0_29] : memref<32x256xf32, #tpu.memory_space<vmem>>, vector<32x256xf32>
    %cst_30 = arith.constant dense<0.000000e+00> : vector<2x256xf32>
    %33 = tpu.matmul %31, %32, %cst_30 {dimension_numbers = #tpu.dot_dimension_numbers<[1], [0], [0], [1], [0, 0, 1, 1], [], []>} : vector<2x32xf32>, vector<32x256xf32>, vector<2x256xf32> -> vector<2x256xf32>
    %34 = vector.extract_strided_slice %33 {offsets = [0, 0], sizes = [1, 256], strides = [1, 1]} : vector<2x256xf32> to vector<1x256xf32>
    %c0_31 = arith.constant 0 : index
    %c0_32 = arith.constant 0 : index
    %35 = vector.load %arg2[%c0_31, %c0_32] : memref<1x256xf32, #tpu.memory_space<vmem>>, vector<1x256xf32>
    %36 = arith.mulf %34, %35 : vector<1x256xf32>
    %c0_33 = arith.constant 0 : index
    %c0_34 = arith.constant 0 : index
    %37 = vector.load %arg3[%c0_33, %c0_34] : memref<1x256xf32, #tpu.memory_space<vmem>>, vector<1x256xf32>
    %38 = vector.extract_strided_slice %33 {offsets = [1, 0], sizes = [1, 256], strides = [1, 1]} : vector<2x256xf32> to vector<1x256xf32>
    %39 = arith.mulf %38, %36 : vector<1x256xf32>
    %40 = arith.subf %37, %39 : vector<1x256xf32>
    %41 = vector.broadcast %36 : vector<1x256xf32> to vector<16x256xf32>
    %42 = arith.mulf %11, %41 : vector<16x256xf32>
    %43 = vector.broadcast %40 : vector<1x256xf32> to vector<16x256xf32>
    %44 = arith.addf %42, %43 : vector<16x256xf32>
    %cst_35 = arith.constant 0.000000e+00 : f32
    %45 = vector.broadcast %cst_35 : f32 to vector<16x256xf32>
    %46 = arith.maximumf %44, %45 : vector<16x256xf32>
    %c0_36 = arith.constant 0 : index
    %c0_37 = arith.constant 0 : index
    %c0_38 = arith.constant 0 : index
    %47 = vector.load %arg0[%c0_36, %c0_37, %c0_38] : memref<2x8x256xf32, #tpu.memory_space<vmem>>, vector<2x8x256xf32>
    %48 = vector.shape_cast %47 : vector<2x8x256xf32> to vector<16x256xf32>
    %49 = vector.shape_cast %46 : vector<16x256xf32> to vector<2x8x256xf32>
    %c0_39 = arith.constant 0 : index
    %c1_40 = arith.constant 1 : index
    %c0_41 = arith.constant 0 : index
    %50 = vector.load %arg10[%c0_39, %c1_40, %c0_41] : memref<2x10x256xf32, #tpu.memory_space<vmem>>, vector<2x8x256xf32>
    tpu.vector_store %arg10[%c0_39, %c1_40, %c0_41], %49 {strides = array<i32>} : memref<2x10x256xf32, #tpu.memory_space<vmem>>, vector<2x8x256xf32>,
    %c0_42 = arith.constant 0 : index
    %c0_43 = arith.constant 0 : index
    %c0_44 = arith.constant 0 : index
    %51 = vector.load %arg10[%c0_42, %c0_43, %c0_44] : memref<2x10x256xf32, #tpu.memory_space<vmem>>, vector<2x8x256xf32>
    %c0_45 = arith.constant 0 : index
    %c1_46 = arith.constant 1 : index
    %c0_47 = arith.constant 0 : index
    %52 = vector.load %arg10[%c0_45, %c1_46, %c0_47] : memref<2x10x256xf32, #tpu.memory_space<vmem>>, vector<2x8x256xf32>
    %c0_48 = arith.constant 0 : index
    %c2_49 = arith.constant 2 : index
    %c0_50 = arith.constant 0 : index
    %53 = vector.load %arg10[%c0_48, %c2_49, %c0_50] : memref<2x10x256xf32, #tpu.memory_space<vmem>>, vector<2x8x256xf32>
    %54 = tpu.concatenate %51, %52, %53 in 2 : vector<2x8x256xf32>, vector<2x8x256xf32>, vector<2x8x256xf32> -> vector<2x8x768xf32>
    %55 = vector.shape_cast %54 : vector<2x8x768xf32> to vector<16x768xf32>
    %c0_51 = arith.constant 0 : index
    %c0_52 = arith.constant 0 : index
    %56 = vector.load %arg4[%c0_51, %c0_52] : memref<768x256xf32, #tpu.memory_space<vmem>>, vector<768x256xf32>
    %cst_53 = arith.constant dense<0.000000e+00> : vector<16x256xf32>
    %57 = tpu.matmul %55, %56, %cst_53 {dimension_numbers = #tpu.dot_dimension_numbers<[1], [0], [0], [1], [0, 0, 1, 1], [], []>} : vector<16x768xf32>, vector<768x256xf32>, vector<16x256xf32> -> vector<16x256xf32>
    %58 = arith.mulf %57, %57 : vector<16x256xf32>
    %59 = tpu.concatenate %57, %58 in 0 : vector<16x256xf32>, vector<16x256xf32> -> vector<32x256xf32>
    %c0_54 = arith.constant 0 : index
    %c0_55 = arith.constant 0 : index
    %60 = vector.load %arg7[%c0_54, %c0_55] : memref<256x32xf32, #tpu.memory_space<vmem>>, vector<256x32xf32>
    %cst_56 = arith.constant dense<0.000000e+00> : vector<32x32xf32>
    %61 = tpu.matmul %59, %60, %cst_56 {dimension_numbers = #tpu.dot_dimension_numbers<[1], [0], [0], [1], [0, 0, 1, 1], [], []>} : vector<32x256xf32>, vector<256x32xf32>, vector<32x32xf32> -> vector<32x32xf32>
    %62 = vector.extract_strided_slice %61 {offsets = [0, 0], sizes = [16, 32], strides = [1, 1]} : vector<32x32xf32> to vector<16x32xf32>
    %cst_57 = arith.constant dense<0.000000e+00> : vector<32xf32>
    %63 = vector.multi_reduction <add>, %62, %cst_57 [0] : vector<16x32xf32> to vector<32xf32>
    %64 = vector.shape_cast %63 : vector<32xf32> to vector<1x32xf32>
    %65 = vector.extract_strided_slice %61 {offsets = [16, 0], sizes = [16, 32], strides = [1, 1]} : vector<32x32xf32> to vector<16x32xf32>
    %cst_58 = arith.constant dense<0.000000e+00> : vector<32xf32>
    %66 = vector.multi_reduction <add>, %65, %cst_58 [0] : vector<16x32xf32> to vector<32xf32>
    %67 = vector.shape_cast %66 : vector<32xf32> to vector<1x32xf32>
    %cst_59 = arith.constant 7.812500e-03 : f32
    %68 = vector.broadcast %cst_59 : f32 to vector<1x32xf32>
    %69 = arith.mulf %64, %68 : vector<1x32xf32>
    %cst_60 = arith.constant 7.812500e-03 : f32
    %70 = vector.broadcast %cst_60 : f32 to vector<1x32xf32>
    %71 = arith.mulf %67, %70 : vector<1x32xf32>
    %72 = arith.mulf %69, %69 : vector<1x32xf32>
    %73 = arith.subf %71, %72 : vector<1x32xf32>
    %cst_61 = arith.constant 9.99999974E-6 : f32
    %74 = vector.broadcast %cst_61 : f32 to vector<1x32xf32>
    %75 = arith.addf %73, %74 : vector<1x32xf32>
    %76 = math.rsqrt %75 : vector<1x32xf32>
    %77 = tpu.concatenate %76, %69 in 0 : vector<1x32xf32>, vector<1x32xf32> -> vector<2x32xf32>
    %c0_62 = arith.constant 0 : index
    %c0_63 = arith.constant 0 : index
    %78 = vector.load %arg8[%c0_62, %c0_63] : memref<32x256xf32, #tpu.memory_space<vmem>>, vector<32x256xf32>
    %cst_64 = arith.constant dense<0.000000e+00> : vector<2x256xf32>
    %79 = tpu.matmul %77, %78, %cst_64 {dimension_numbers = #tpu.dot_dimension_numbers<[1], [0], [0], [1], [0, 0, 1, 1], [], []>} : vector<2x32xf32>, vector<32x256xf32>, vector<2x256xf32> -> vector<2x256xf32>
    %80 = vector.extract_strided_slice %79 {offsets = [0, 0], sizes = [1, 256], strides = [1, 1]} : vector<2x256xf32> to vector<1x256xf32>
    %c0_65 = arith.constant 0 : index
    %c0_66 = arith.constant 0 : index
    %81 = vector.load %arg5[%c0_65, %c0_66] : memref<1x256xf32, #tpu.memory_space<vmem>>, vector<1x256xf32>
    %82 = arith.mulf %80, %81 : vector<1x256xf32>
    %c0_67 = arith.constant 0 : index
    %c0_68 = arith.constant 0 : index
    %83 = vector.load %arg6[%c0_67, %c0_68] : memref<1x256xf32, #tpu.memory_space<vmem>>, vector<1x256xf32>
    %84 = vector.extract_strided_slice %79 {offsets = [1, 0], sizes = [1, 256], strides = [1, 1]} : vector<2x256xf32> to vector<1x256xf32>
    %85 = arith.mulf %84, %82 : vector<1x256xf32>
    %86 = arith.subf %83, %85 : vector<1x256xf32>
    %87 = vector.broadcast %82 : vector<1x256xf32> to vector<16x256xf32>
    %88 = arith.mulf %57, %87 : vector<16x256xf32>
    %89 = vector.broadcast %86 : vector<1x256xf32> to vector<16x256xf32>
    %90 = arith.addf %88, %89 : vector<16x256xf32>
    %91 = arith.addf %90, %48 : vector<16x256xf32>
    %cst_69 = arith.constant 0.000000e+00 : f32
    %92 = vector.broadcast %cst_69 : f32 to vector<16x256xf32>
    %93 = arith.maximumf %91, %92 : vector<16x256xf32>
    %c0_70 = arith.constant 0 : index
    %c0_71 = arith.constant 0 : index
    %94 = vector.load %arg9[%c0_70, %c0_71] : memref<16x256xf32, #tpu.memory_space<vmem>>, vector<16x256xf32>
    tpu.vector_store %arg9[%c0_70, %c0_71], %93 {strides = array<i32>} : memref<16x256xf32, #tpu.memory_space<vmem>>, vector<16x256xf32>,
    return
  }
}

</mosaic_0001>

<llo_original>
// kernel: tpu_custom_call.1
$region0: #{tpu_custom_call.1}
  #allocation0 [shape = 'u32[]', space=smem, size = 0x4, offset = 0x4, fixed_abs, tag = 'smem constant byte address 0x4 - core index']
  #allocation1 [shape = 'u32[144,128]{1,0:T(1,128)}', space=vmem, size = 0x12000, scoped, tag = 'internal scratch']
  #allocation2 [shape = 'f32[2,10,256]{2,1,0:T(8,128)}', space=vmem, size = 0x8000, scoped, tag = 'scratch operand']
  %s0 = inlined_call_operand.vmem [shape: f32[2,8,256], index: 0, kind: input, shape index: {}]
  %s1 = inlined_call_operand.hbm [shape: f32[768,256], index: 1, kind: input, shape index: {}]
  %s2 = inlined_call_operand.vmem [shape: f32[1,256], index: 2, kind: input, shape index: {}]
  %s3 = inlined_call_operand.vmem [shape: f32[1,256], index: 3, kind: input, shape index: {}]
  %s4 = inlined_call_operand.hbm [shape: f32[768,256], index: 4, kind: input, shape index: {}]
  %s5 = inlined_call_operand.vmem [shape: f32[1,256], index: 5, kind: input, shape index: {}]
  %s6 = inlined_call_operand.vmem [shape: f32[1,256], index: 6, kind: input, shape index: {}]
  %s7 = inlined_call_operand.vmem [shape: f32[256,32], index: 7, kind: input, shape index: {}]
  %s8 = inlined_call_operand.vmem [shape: f32[32,256], index: 8, kind: input, shape index: {}]
  %s9 = inlined_call_operand.hbm [shape: f32[16,256], index: 9, kind: output, shape index: {}]
  %s10 = sld [smem:[#allocation0]]
  $region54: #{tpu_custom_call.1} parent=0
    _
  %s12 = ssub.s32 1, %s10
  %s13 = scalar_select 0, %s12, %s10
  $region1: #{tpu_custom_call.1} parent=0
    #allocation3 [shape = 'u8[786432]{0}', space=vmem, size = 0xc0000, scoped, tag = 'input window, operand 1, single buffered']
    #allocation4 [shape = 's32[1]{0}', space=sflag, size = 0x4, scoped, tag = 'scoped memory for tpu_custom_call.1']
    #allocation5 [shape = 's32[1]{0}', space=sflag, size = 0x4, scoped, tag = 'scoped memory for tpu_custom_call.1']
    #allocation6 [shape = 'u8[786432]{0}', space=vmem, size = 0xc0000, scoped, tag = 'input window, operand 4, single buffered']
    #allocation7 [shape = 's32[1]{0}', space=sflag, size = 0x4, scoped, tag = 'scoped memory for tpu_custom_call.1']
    #allocation8 [shape = 'u8[16384]{0}', space=vmem, size = 0x4000, scoped, tag = 'output window, operand 0, single buffered']
    %14 = vsyncpa [#allocation4], 0
    %15 = vsyncpa [#allocation7], 0
    %16 = vsyncpa [#allocation5], 0
    // Predicated region
    $region2: #{tpu_custom_call.1} parent=1 // pred_check
      _
    $region3: #{tpu_custom_call.1} parent=1 // pred_check_branch
      %18 = sbr.rel (0) target = $region5
    $region4: #{tpu_custom_call.1} parent=1 // pred_region
      _
    $region5: #{tpu_custom_call.1} parent=1 // pred_fallthru
      _
    // Predicated region
    $region6: #{tpu_custom_call.1} parent=1 // pred_check
      _
    $region7: #{tpu_custom_call.1} parent=1 // pred_check_branch
      %20 = sbr.rel (0) target = $region9
    $region8: #{tpu_custom_call.1} parent=1 // pred_region
      %s22 = ssub.s32 24576, 24576
      %23 = vsyncadd [#allocation4], %s22
      %s24 = sshll.u32 [#allocation3], 4
      %s25 = int_to_ptr.vmem [resolvable:$true] %s24
      %30 = dma.hbm_to_vmem [thread:$0]  %s1, 24576, %s25, [#allocation4], 256, 256, 16
    $region9: #{tpu_custom_call.1} parent=1 // pred_fallthru
      _
    // Predicated region
    $region10: #{tpu_custom_call.1} parent=1 // pred_check
      _
    $region11: #{tpu_custom_call.1} parent=1 // pred_check_branch
      %32 = sbr.rel (0) target = $region13
    $region12: #{tpu_custom_call.1} parent=1 // pred_region
      _
    $region13: #{tpu_custom_call.1} parent=1 // pred_fallthru
      _
    // Predicated region
    $region14: #{tpu_custom_call.1} parent=1 // pred_check
      _
    $region15: #{tpu_custom_call.1} parent=1 // pred_check_branch
      %34 = sbr.rel (0) target = $region17
    $region16: #{tpu_custom_call.1} parent=1 // pred_region
      _
    $region17: #{tpu_custom_call.1} parent=1 // pred_fallthru
      _
    // Predicated region
    $region18: #{tpu_custom_call.1} parent=1 // pred_check
      _
    $region19: #{tpu_custom_call.1} parent=1 // pred_check_branch
      %36 = sbr.rel (0) target = $region21
    $region20: #{tpu_custom_call.1} parent=1 // pred_region
      %s38 = ssub.s32 24576, 24576
      %39 = vsyncadd [#allocation7], %s38
      %s40 = sshll.u32 [#allocation6], 4
      %s41 = int_to_ptr.vmem [resolvable:$true] %s40
      %46 = dma.hbm_to_vmem [thread:$0]  %s4, 24576, %s41, [#allocation7], 256, 256, 16
    $region21: #{tpu_custom_call.1} parent=1 // pred_fallthru
      _
    // Predicated region
    $region22: #{tpu_custom_call.1} parent=1 // pred_check
      _
    $region23: #{tpu_custom_call.1} parent=1 // pred_check_branch
      %48 = sbr.rel (0) target = $region25
    $region24: #{tpu_custom_call.1} parent=1 // pred_region
      _
    $region25: #{tpu_custom_call.1} parent=1 // pred_fallthru
      _
    // Predicated region
    $region26: #{tpu_custom_call.1} parent=1 // pred_check
      _
    $region27: #{tpu_custom_call.1} parent=1 // pred_check_branch
      %50 = sbr.rel (0) target = $region29
    $region28: #{tpu_custom_call.1} parent=1 // pred_region
      _
    $region29: #{tpu_custom_call.1} parent=1 // pred_fallthru
      _
    // Predicated region
    $region30: #{tpu_custom_call.1} parent=1 // pred_check
      _
    $region31: #{tpu_custom_call.1} parent=1 // pred_check_branch
      %52 = sbr.rel (0) target = $region33
    $region32: #{tpu_custom_call.1} parent=1 // pred_region
      _
    $region33: #{tpu_custom_call.1} parent=1 // pred_fallthru
      _
    // Predicated region
    $region34: #{tpu_custom_call.1} parent=1 // pred_check
      _
    $region35: #{tpu_custom_call.1} parent=1 // pred_check_branch
      %54 = sbr.rel (0) target = $region37
    $region36: #{tpu_custom_call.1} parent=1 // pred_region
      _
    $region37: #{tpu_custom_call.1} parent=1 // pred_fallthru
      _
    // Predicated region
    $region38: #{tpu_custom_call.1} parent=1 // pred_check
      _
    $region39: #{tpu_custom_call.1} parent=1 // pred_check_branch
      %56 = sbr.rel (0) target = $region41
    $region40: #{tpu_custom_call.1} parent=1 // pred_region
      %57 = dma.done [#allocation4], 24576
    $region41: #{tpu_custom_call.1} parent=1 // pred_fallthru
      _
    // Predicated region
    $region42: #{tpu_custom_call.1} parent=1 // pred_check
      _
    $region43: #{tpu_custom_call.1} parent=1 // pred_check_branch
      %59 = sbr.rel (0) target = $region45
    $region44: #{tpu_custom_call.1} parent=1 // pred_region
      %60 = dma.done [#allocation7], 24576
    $region45: #{tpu_custom_call.1} parent=1 // pred_fallthru
      _
    %v61 = vlaneseq
    %vm62 = vcmp.ge.s32.totalorder %v61, 0
    %vm63 = vcmp.lt.s32.totalorder %v61, 256
    %vm64 = vmand %vm62, %vm63
    %65 = vst.msk [vmem:[#allocation2] ss:$8 sm:$0x3] %vm64, 0.0
    %66 = vst.msk [vmem:[#allocation2] ss:$8 sm:$0x0] %vm64, 0.0
    %s67 = scalar_lea.vmem [#allocation2], 32
    %68 = vst.msk [vmem:[%s67] ss:$8 sm:$0x3] %vm64, 0.0
    %69 = vst.msk [vmem:[%s67] ss:$8 sm:$0x0] %vm64, 0.0
    %s70 = scalar_lea.vmem [#allocation2], 17
    %71 = vst.msk [vmem:[%s70] ss:$8 sm:$0x3] %vm64, 0.0
    %72 = vst.msk [vmem:[%s70] ss:$8 sm:$0x0] %vm64, 0.0
    %s73 = scalar_lea.vmem [#allocation2], 49
    %74 = vst.msk [vmem:[%s73] ss:$8 sm:$0x3] %vm64, 0.0
    %75 = vst.msk [vmem:[%s73] ss:$8 sm:$0x0] %vm64, 0.0
    %v76 = vld [vmem:[%s0] sm:$0xff]
    %v77 = vld [vmem:[%s0 + $0x8] sm:$0xff]
    %v78 = vld [vmem:[%s0 + $0x10] sm:$0xff]
    %v79 = vld [vmem:[%s0 + $0x18] sm:$0xff]
    %v84 = vrot.slane %v76, 7
    %v85 = vrot.slane %v77, 7
    %v86 = vrot.slane %v78, 7
    %v87 = vrot.slane %v79, 7
    %92 = vst [vmem:[#allocation2] sm:$0xfe] %v84
    %93 = vst [vmem:[#allocation2 + $0x8] sm:$0xfe] %v85
    %94 = vst [vmem:[#allocation2 + $0x10] sm:$0x1] %v84
    %95 = vst [vmem:[#allocation2 + $0x18] sm:$0x1] %v85
    %96 = vst [vmem:[#allocation2 + $0x20] sm:$0xfe] %v86
    %97 = vst [vmem:[#allocation2 + $0x28] sm:$0xfe] %v87
    %98 = vst [vmem:[#allocation2 + $0x30] sm:$0x1] %v86
    %99 = vst [vmem:[#allocation2 + $0x38] sm:$0x1] %v87
    %v100 = vld [vmem:[#allocation2] sm:$0xff]
    %v101 = vld [vmem:[#allocation2 + $0x8] sm:$0xff]
    %v102 = vld [vmem:[#allocation2 + $0x20] sm:$0xff]
    %v103 = vld [vmem:[#allocation2 + $0x28] sm:$0xff]
    %v104 = vld [vmem:[#allocation2] sm:$0xfe]
    %v105 = vld [vmem:[#allocation2 + $0x8] sm:$0xfe]
    %v106 = vld [vmem:[#allocation2 + $0x10] sm:$0x1]
    %v107 = vld [vmem:[#allocation2 + $0x18] sm:$0x1]
    %v108 = vld [vmem:[#allocation2 + $0x20] sm:$0xfe]
    %v109 = vld [vmem:[#allocation2 + $0x28] sm:$0xfe]
    %v110 = vld [vmem:[#allocation2 + $0x30] sm:$0x1]
    %v111 = vld [vmem:[#allocation2 + $0x38] sm:$0x1]
    %v112 = vld [vmem:[#allocation2] sm:$0xfc]
    %v113 = vld [vmem:[#allocation2 + $0x8] sm:$0xfc]
    %v114 = vld [vmem:[#allocation2 + $0x10] sm:$0x3]
    %v115 = vld [vmem:[#allocation2 + $0x18] sm:$0x3]
    %v116 = vld [vmem:[#allocation2 + $0x20] sm:$0xfc]
    %v117 = vld [vmem:[#allocation2 + $0x28] sm:$0xfc]
    %v118 = vld [vmem:[#allocation2 + $0x30] sm:$0x3]
    %v119 = vld [vmem:[#allocation2 + $0x38] sm:$0x3]
    %vm128 = vcmask 1046528
    %v129 = vrot.slane %v104, 1
    %v130 = vrot.slane %v106, 1
    %v131 = vsel %vm128, %v129, %v130
    %v132 = vrot.slane %v105, 1
    %v133 = vrot.slane %v107, 1
    %v134 = vsel %vm128, %v132, %v133
    %v135 = vrot.slane %v108, 1
    %v136 = vrot.slane %v110, 1
    %v137 = vsel %vm128, %v135, %v136
    %v138 = vrot.slane %v109, 1
    %v139 = vrot.slane %v111, 1
    %v140 = vsel %vm128, %v138, %v139
    %vm153 = vcmask 1045504
    %v154 = vrot.slane %v112, 2
    %v155 = vrot.slane %v114, 2
    %v156 = vsel %vm153, %v154, %v155
    %v157 = vrot.slane %v113, 2
    %v158 = vrot.slane %v115, 2
    %v159 = vsel %vm153, %v157, %v158
    %v160 = vrot.slane %v116, 2
    %v161 = vrot.slane %v118, 2
    %v162 = vsel %vm153, %v160, %v161
    %v163 = vrot.slane %v117, 2
    %v164 = vrot.slane %v119, 2
    %v165 = vsel %vm153, %v163, %v164
    %v170 = vld [vmem:[#allocation3] sm:$0xff]
    %v171 = vld [vmem:[#allocation3 + $0x8] sm:$0xff]
    %v172 = vld [vmem:[#allocation3 + $0x10] sm:$0xff]
    %v173 = vld [vmem:[#allocation3 + $0x18] sm:$0xff]
    %v174 = vld [vmem:[#allocation3 + $0x20] sm:$0xff]
    %v175 = vld [vmem:[#allocation3 + $0x28] sm:$0xff]
    %v176 = vld [vmem:[#allocation3 + $0x30] sm:$0xff]
    %v177 = vld [vmem:[#allocation3 + $0x38] sm:$0xff]
    %v178 = vld [vmem:[#allocation3 + $0x40] sm:$0xff]
    %v179 = vld [vmem:[#allocation3 + $0x48] sm:$0xff]
    %v180 = vld [vmem:[#allocation3 + $0x50] sm:$0xff]
    %v181 = vld [vmem:[#allocation3 + $0x58] sm:$0xff]
    %v182 = vld [vmem:[#allocation3 + $0x60] sm:$0xff]
    %v183 = vld [vmem:[#allocation3 + $0x68] sm:$0xff]
    %v184 = vld [vmem:[#allocation3 + $0x70] sm:$0xff]
    %v185 = vld [vmem:[#allocation3 + $0x78] sm:$0xff]
    %v186 = vld [vmem:[#allocation3 + $0x80] sm:$0xff]
    %v187 = vld [vmem:[#allocation3 + $0x88] sm:$0xff]
    %v188 = vld [vmem:[#allocation3 + $0x90] sm:$0xff]
    %v189 = vld [vmem:[#allocation3 + $0x98] sm:$0xff]
    %v190 = vld [vmem:[#allocation3 + $0xa0] sm:$0xff]
    %v191 = vld [vmem:[#allocation3 + $0xa8] sm:$0xff]
    %v192 = vld [vmem:[#allocation3 + $0xb0] sm:$0xff]
    %v193 = vld [vmem:[#allocation3 + $0xb8] sm:$0xff]
    %v194 = vld [vmem:[#allocation3 + $0xc0] sm:$0xff]
    %v195 = vld [vmem:[#allocation3 + $0xc8] sm:$0xff]
    %v196 = vld [vmem:[#allocation3 + $0xd0] sm:$0xff]
    %v197 = vld [vmem:[#allocation3 + $0xd8] sm:$0xff]
    %v198 = vld [vmem:[#allocation3 + $0xe0] sm:$0xff]
    %v199 = vld [vmem:[#allocation3 + $0xe8] sm:$0xff]
    %v200 = vld [vmem:[#allocation3 + $0xf0] sm:$0xff]
    %v201 = vld [vmem:[#allocation3 + $0xf8] sm:$0xff]
    %v202 = vld [vmem:[#allocation3 + $0x100] sm:$0xff]
    %v203 = vld [vmem:[#allocation3 + $0x108] sm:$0xff]
    %v204 = vld [vmem:[#allocation3 + $0x110] sm:$0xff]
    %v205 = vld [vmem:[#allocation3 + $0x118] sm:$0xff]
    %v206 = vld [vmem:[#allocation3 + $0x120] sm:$0xff]
    %v207 = vld [vmem:[#allocation3 + $0x128] sm:$0xff]
    %v208 = vld [vmem:[#allocation3 + $0x130] sm:$0xff]
    %v209 = vld [vmem:[#allocation3 + $0x138] sm:$0xff]
    %v210 = vld [vmem:[#allocation3 + $0x140] sm:$0xff]
    %v211 = vld [vmem:[#allocation3 + $0x148] sm:$0xff]
    %v212 = vld [vmem:[#allocation3 + $0x150] sm:$0xff]
    %v213 = vld [vmem:[#allocation3 + $0x158] sm:$0xff]
    %v214 = vld [vmem:[#allocation3 + $0x160] sm:$0xff]
    %v215 = vld [vmem:[#allocation3 + $0x168] sm:$0xff]
    %v216 = vld [vmem:[#allocation3 + $0x170] sm:$0xff]
    %v217 = vld [vmem:[#allocation3 + $0x178] sm:$0xff]
    %v218 = vld [vmem:[#allocation3 + $0x180] sm:$0xff]
    %v219 = vld [vmem:[#allocation3 + $0x188] sm:$0xff]
    %v220 = vld [vmem:[#allocation3 + $0x190] sm:$0xff]
    %v221 = vld [vmem:[#allocation3 + $0x198] sm:$0xff]
    %v222 = vld [vmem:[#allocation3 + $0x1a0] sm:$0xff]
    %v223 = vld [vmem:[#allocation3 + $0x1a8] sm:$0xff]
    %v224 = vld [vmem:[#allocation3 + $0x1b0] sm:$0xff]
    %v225 = vld [vmem:[#allocation3 + $0x1b8] sm:$0xff]
    %v226 = vld [vmem:[#allocation3 + $0x1c0] sm:$0xff]
    %v227 = vld [vmem:[#allocation3 + $0x1c8] sm:$0xff]
    %v228 = vld [vmem:[#allocation3 + $0x1d0] sm:$0xff]
    %v229 = vld [vmem:[#allocation3 + $0x1d8] sm:$0xff]
    %v230 = vld [vmem:[#allocation3 + $0x1e0] sm:$0xff]
    %v231 = vld [vmem:[#allocation3 + $0x1e8] sm:$0xff]
    %v232 = vld [vmem:[#allocation3 + $0x1f0] sm:$0xff]
    %v233 = vld [vmem:[#allocation3 + $0x1f8] sm:$0xff]
    %v234 = vld [vmem:[#allocation3 + $0x200] sm:$0xff]
    %v235 = vld [vmem:[#allocation3 + $0x208] sm:$0xff]
    %v236 = vld [vmem:[#allocation3 + $0x210] sm:$0xff]
    %v237 = vld [vmem:[#allocation3 + $0x218] sm:$0xff]
    %v238 = vld [vmem:[#allocation3 + $0x220] sm:$0xff]
    %v239 = vld [vmem:[#allocation3 + $0x228] sm:$0xff]
    %v240 = vld [vmem:[#allocation3 + $0x230] sm:$0xff]
    %v241 = vld [vmem:[#allocation3 + $0x238] sm:$0xff]
    %v242 = vld [vmem:[#allocation3 + $0x240] sm:$0xff]
    %v243 = vld [vmem:[#allocation3 + $0x248] sm:$0xff]
    %v244 = vld [vmem:[#allocation3 + $0x250] sm:$0xff]
    %v245 = vld [vmem:[#allocation3 + $0x258] sm:$0xff]
    %v246 = vld [vmem:[#allocation3 + $0x260] sm:$0xff]
    %v247 = vld [vmem:[#allocation3 + $0x268] sm:$0xff]
    %v248 = vld [vmem:[#allocation3 + $0x270] sm:$0xff]
    %v249 = vld [vmem:[#allocation3 + $0x278] sm:$0xff]
    %v250 = vld [vmem:[#allocation3 + $0x280] sm:$0xff]
    %v251 = vld [vmem:[#allocation3 + $0x288] sm:$0xff]
    %v252 = vld [vmem:[#allocation3 + $0x290] sm:$0xff]
    %v253 = vld [vmem:[#allocation3 + $0x298] sm:$0xff]
    %v254 = vld [vmem:[#allocation3 + $0x2a0] sm:$0xff]
    %v255 = vld [vmem:[#allocation3 + $0x2a8] sm:$0xff]
    %v256 = vld [vmem:[#allocation3 + $0x2b0] sm:$0xff]
    %v257 = vld [vmem:[#allocation3 + $0x2b8] sm:$0xff]
    %v258 = vld [vmem:[#allocation3 + $0x2c0] sm:$0xff]
    %v259 = vld [vmem:[#allocation3 + $0x2c8] sm:$0xff]
    %v260 = vld [vmem:[#allocation3 + $0x2d0] sm:$0xff]
    %v261 = vld [vmem:[#allocation3 + $0x2d8] sm:$0xff]
    %v262 = vld [vmem:[#allocation3 + $0x2e0] sm:$0xff]
    %v263 = vld [vmem:[#allocation3 + $0x2e8] sm:$0xff]
    %v264 = vld [vmem:[#allocation3 + $0x2f0] sm:$0xff]
    %v265 = vld [vmem:[#allocation3 + $0x2f8] sm:$0xff]
    %v266 = vld [vmem:[#allocation3 + $0x300] sm:$0xff]
    %v267 = vld [vmem:[#allocation3 + $0x308] sm:$0xff]
    %v268 = vld [vmem:[#allocation3 + $0x310] sm:$0xff]
    %v269 = vld [vmem:[#allocation3 + $0x318] sm:$0xff]
    %v270 = vld [vmem:[#allocation3 + $0x320] sm:$0xff]
    %v271 = vld [vmem:[#allocation3 + $0x328] sm:$0xff]
    %v272 = vld [vmem:[#allocation3 + $0x330] sm:$0xff]
    %v273 = vld [vmem:[#allocation3 + $0x338] sm:$0xff]
    %v274 = vld [vmem:[#allocation3 + $0x340] sm:$0xff]
    %v275 = vld [vmem:[#allocation3 + $0x348] sm:$0xff]
    %v276 = vld [vmem:[#allocation3 + $0x350] sm:$0xff]
    %v277 = vld [vmem:[#allocation3 + $0x358] sm:$0xff]
    %v278 = vld [vmem:[#allocation3 + $0x360] sm:$0xff]
    %v279 = vld [vmem:[#allocation3 + $0x368] sm:$0xff]
    %v280 = vld [vmem:[#allocation3 + $0x370] sm:$0xff]
    %v281 = vld [vmem:[#allocation3 + $0x378] sm:$0xff]
    %v282 = vld [vmem:[#allocation3 + $0x380] sm:$0xff]
    %v283 = vld [vmem:[#allocation3 + $0x388] sm:$0xff]
    %v284 = vld [vmem:[#allocation3 + $0x390] sm:$0xff]
    %v285 = vld [vmem:[#allocation3 + $0x398] sm:$0xff]
    %v286 = vld [vmem:[#allocation3 + $0x3a0] sm:$0xff]
    %v287 = vld [vmem:[#allocation3 + $0x3a8] sm:$0xff]
    %v288 = vld [vmem:[#allocation3 + $0x3b0] sm:$0xff]
    %v289 = vld [vmem:[#allocation3 + $0x3b8] sm:$0xff]
    %v290 = vld [vmem:[#allocation3 + $0x3c0] sm:$0xff]
    %v291 = vld [vmem:[#allocation3 + $0x3c8] sm:$0xff]
    %v292 = vld [vmem:[#allocation3 + $0x3d0] sm:$0xff]
    %v293 = vld [vmem:[#allocation3 + $0x3d8] sm:$0xff]
    %v294 = vld [vmem:[#allocation3 + $0x3e0] sm:$0xff]
    %v295 = vld [vmem:[#allocation3 + $0x3e8] sm:$0xff]
    %v296 = vld [vmem:[#allocation3 + $0x3f0] sm:$0xff]
    %v297 = vld [vmem:[#allocation3 + $0x3f8] sm:$0xff]
    %v298 = vld [vmem:[#allocation3 + $0x400] sm:$0xff]
    %v299 = vld [vmem:[#allocation3 + $0x408] sm:$0xff]
    %v300 = vld [vmem:[#allocation3 + $0x410] sm:$0xff]
    %v301 = vld [vmem:[#allocation3 + $0x418] sm:$0xff]
    %v302 = vld [vmem:[#allocation3 + $0x420] sm:$0xff]
    %v303 = vld [vmem:[#allocation3 + $0x428] sm:$0xff]
    %v304 = vld [vmem:[#allocation3 + $0x430] sm:$0xff]
    %v305 = vld [vmem:[#allocation3 + $0x438] sm:$0xff]
    %v306 = vld [vmem:[#allocation3 + $0x440] sm:$0xff]
    %v307 = vld [vmem:[#allocation3 + $0x448] sm:$0xff]
    %v308 = vld [vmem:[#allocation3 + $0x450] sm:$0xff]
    %v309 = vld [vmem:[#allocation3 + $0x458] sm:$0xff]
    %v310 = vld [vmem:[#allocation3 + $0x460] sm:$0xff]
    %v311 = vld [vmem:[#allocation3 + $0x468] sm:$0xff]
    %v312 = vld [vmem:[#allocation3 + $0x470] sm:$0xff]
    %v313 = vld [vmem:[#allocation3 + $0x478] sm:$0xff]
    %v314 = vld [vmem:[#allocation3 + $0x480] sm:$0xff]
    %v315 = vld [vmem:[#allocation3 + $0x488] sm:$0xff]
    %v316 = vld [vmem:[#allocation3 + $0x490] sm:$0xff]
    %v317 = vld [vmem:[#allocation3 + $0x498] sm:$0xff]
    %v318 = vld [vmem:[#allocation3 + $0x4a0] sm:$0xff]
    %v319 = vld [vmem:[#allocation3 + $0x4a8] sm:$0xff]
    %v320 = vld [vmem:[#allocation3 + $0x4b0] sm:$0xff]
    %v321 = vld [vmem:[#allocation3 + $0x4b8] sm:$0xff]
    %v322 = vld [vmem:[#allocation3 + $0x4c0] sm:$0xff]
    %v323 = vld [vmem:[#allocation3 + $0x4c8] sm:$0xff]
    %v324 = vld [vmem:[#allocation3 + $0x4d0] sm:$0xff]
    %v325 = vld [vmem:[#allocation3 + $0x4d8] sm:$0xff]
    %v326 = vld [vmem:[#allocation3 + $0x4e0] sm:$0xff]
    %v327 = vld [vmem:[#allocation3 + $0x4e8] sm:$0xff]
    %v328 = vld [vmem:[#allocation3 + $0x4f0] sm:$0xff]
    %v329 = vld [vmem:[#allocation3 + $0x4f8] sm:$0xff]
    %v330 = vld [vmem:[#allocation3 + $0x500] sm:$0xff]
    %v331 = vld [vmem:[#allocation3 + $0x508] sm:$0xff]
    %v332 = vld [vmem:[#allocation3 + $0x510] sm:$0xff]
    %v333 = vld [vmem:[#allocation3 + $0x518] sm:$0xff]
    %v334 = vld [vmem:[#allocation3 + $0x520] sm:$0xff]
    %v335 = vld [vmem:[#allocation3 + $0x528] sm:$0xff]
    %v336 = vld [vmem:[#allocation3 + $0x530] sm:$0xff]
    %v337 = vld [vmem:[#allocation3 + $0x538] sm:$0xff]
    %v338 = vld [vmem:[#allocation3 + $0x540] sm:$0xff]
    %v339 = vld [vmem:[#allocation3 + $0x548] sm:$0xff]
    %v340 = vld [vmem:[#allocation3 + $0x550] sm:$0xff]
    %v341 = vld [vmem:[#allocation3 + $0x558] sm:$0xff]
    %v342 = vld [vmem:[#allocation3 + $0x560] sm:$0xff]
    %v343 = vld [vmem:[#allocation3 + $0x568] sm:$0xff]
    %v344 = vld [vmem:[#allocation3 + $0x570] sm:$0xff]
    %v345 = vld [vmem:[#allocation3 + $0x578] sm:$0xff]
    %v346 = vld [vmem:[#allocation3 + $0x580] sm:$0xff]
    %v347 = vld [vmem:[#allocation3 + $0x588] sm:$0xff]
    %v348 = vld [vmem:[#allocation3 + $0x590] sm:$0xff]
    %v349 = vld [vmem:[#allocation3 + $0x598] sm:$0xff]
    %v350 = vld [vmem:[#allocation3 + $0x5a0] sm:$0xff]
    %v351 = vld [vmem:[#allocation3 + $0x5a8] sm:$0xff]
    %v352 = vld [vmem:[#allocation3 + $0x5b0] sm:$0xff]
    %v353 = vld [vmem:[#allocation3 + $0x5b8] sm:$0xff]
    %v354 = vld [vmem:[#allocation3 + $0x5c0] sm:$0xff]
    %v355 = vld [vmem:[#allocation3 + $0x5c8] sm:$0xff]
    %v356 = vld [vmem:[#allocation3 + $0x5d0] sm:$0xff]
    %v357 = vld [vmem:[#allocation3 + $0x5d8] sm:$0xff]
    %v358 = vld [vmem:[#allocation3 + $0x5e0] sm:$0xff]
    %v359 = vld [vmem:[#allocation3 + $0x5e8] sm:$0xff]
    %v360 = vld [vmem:[#allocation3 + $0x5f0] sm:$0xff]
    %v361 = vld [vmem:[#allocation3 + $0x5f8] sm:$0xff]
    %362 = vmatprep.subr.mxu0 %v171
    %363 = vmatpush1.msra.mxu0 %v170
    %364 = vmatprep.subr.mxu0 %v173
    %365 = vmatpush1.msra.mxu0 %v172
    %366 = vmatprep.subr.mxu0 %v175
    %367 = vmatpush1.msra.mxu0 %v174
    %368 = vmatprep.subr.mxu0 %v177
    %369 = vmatpush1.msra.mxu0 %v176
    %370 = vmatprep.subr.mxu0 %v179
    %371 = vmatpush1.msra.mxu0 %v178
    %372 = vmatprep.subr.mxu0 %v181
    %373 = vmatpush1.msra.mxu0 %v180
    %374 = vmatprep.subr.mxu0 %v183
    %375 = vmatpush1.msra.mxu0 %v182
    %376 = vmatprep.subr.mxu0 %v185
    %377 = vmatpush1.msra.mxu0 %v184
    %378 = vmatprep.subr.mxu0 %v187
    %379 = vmatpush1.msra.mxu0 %v186
    %380 = vmatprep.subr.mxu0 %v189
    %381 = vmatpush1.msra.mxu0 %v188
    %382 = vmatprep.subr.mxu0 %v191
    %383 = vmatpush1.msra.mxu0 %v190
    %384 = vmatprep.subr.mxu0 %v193
    %385 = vmatpush1.msra.mxu0 %v192
    %386 = vmatprep.subr.mxu0 %v195
    %387 = vmatpush1.msra.mxu0 %v194
    %388 = vmatprep.subr.mxu0 %v197
    %389 = vmatpush1.msra.mxu0 %v196
    %390 = vmatprep.subr.mxu0 %v199
    %391 = vmatpush1.msra.mxu0 %v198
    %392 = vmatprep.subr.mxu0 %v201
    %393 = vmatpush1.msra.mxu0 %v200
    %394 = vmatprep.subr.mxu0 %v203
    %395 = vmatpush1.msra.mxu0 %v202
    %396 = vmatprep.subr.mxu0 %v205
    %397 = vmatpush1.msra.mxu0 %v204
    %398 = vmatprep.subr.mxu0 %v207
    %399 = vmatpush1.msra.mxu0 %v206
    %400 = vmatprep.subr.mxu0 %v209
    %401 = vmatpush1.msra.mxu0 %v208
    %402 = vmatprep.subr.mxu0 %v211
    %403 = vmatpush1.msra.mxu0 %v210
    %404 = vmatprep.subr.mxu0 %v213
    %405 = vmatpush1.msra.mxu0 %v212
    %406 = vmatprep.subr.mxu0 %v215
    %407 = vmatpush1.msra.mxu0 %v214
    %408 = vmatprep.subr.mxu0 %v217
    %409 = vmatpush1.msra.mxu0 %v216
    %410 = vmatprep.subr.mxu0 %v219
    %411 = vmatpush1.msra.mxu0 %v218
    %412 = vmatprep.subr.mxu0 %v221
    %413 = vmatpush1.msra.mxu0 %v220
    %414 = vmatprep.subr.mxu0 %v223
    %415 = vmatpush1.msra.mxu0 %v222
    %416 = vmatprep.subr.mxu0 %v225
    %417 = vmatpush1.msra.mxu0 %v224
    %418 = vmatprep.subr.mxu0 %v227
    %419 = vmatpush1.msra.mxu0 %v226
    %420 = vmatprep.subr.mxu0 %v229
    %421 = vmatpush1.msra.mxu0 %v228
    %422 = vmatprep.subr.mxu0 %v231
    %423 = vmatpush1.msra.mxu0 %v230
    %424 = vmatprep.subr.mxu0 %v233
    %425 = vmatpush1.msra.mxu0 %v232
    %426 = vmatprep.mubr.f32.mxu0 %v101
    %427 = vmatmul.mubr.f32.gmra.mrb[0].mxu0 %v100
    %v428 = vpop.f32.mrb[0].mxu0
    %v429 = vadd.f32 0.0, %v428
    %v430 = vpop.f32.mrb[0].mxu0
    %v431 = vadd.f32 0.0, %v430
    %432 = vmatprep.mubr.f32.mxu0 %v103
    %433 = vmatmul.mubr.f32.gmra.mrb[0].mxu0 %v102
    %v434 = vpop.f32.mrb[0].mxu0
    %v435 = vadd.f32 0.0, %v434
    %v436 = vpop.f32.mrb[0].mxu0
    %v437 = vadd.f32 0.0, %v436
    %438 = vdwg.mxu0
    %439 = vmatprep.subr.mxu0 %v235
    %440 = vmatpush1.msra.mxu0 %v234
    %441 = vmatprep.subr.mxu0 %v237
    %442 = vmatpush1.msra.mxu0 %v236
    %443 = vmatprep.subr.mxu0 %v239
    %444 = vmatpush1.msra.mxu0 %v238
    %445 = vmatprep.subr.mxu0 %v241
    %446 = vmatpush1.msra.mxu0 %v240
    %447 = vmatprep.subr.mxu0 %v243
    %448 = vmatpush1.msra.mxu0 %v242
    %449 = vmatprep.subr.mxu0 %v245
    %450 = vmatpush1.msra.mxu0 %v244
    %451 = vmatprep.subr.mxu0 %v247
    %452 = vmatpush1.msra.mxu0 %v246
    %453 = vmatprep.subr.mxu0 %v249
    %454 = vmatpush1.msra.mxu0 %v248
    %455 = vmatprep.subr.mxu0 %v251
    %456 = vmatpush1.msra.mxu0 %v250
    %457 = vmatprep.subr.mxu0 %v253
    %458 = vmatpush1.msra.mxu0 %v252
    %459 = vmatprep.subr.mxu0 %v255
    %460 = vmatpush1.msra.mxu0 %v254
    %461 = vmatprep.subr.mxu0 %v257
    %462 = vmatpush1.msra.mxu0 %v256
    %463 = vmatprep.subr.mxu0 %v259
    %464 = vmatpush1.msra.mxu0 %v258
    %465 = vmatprep.subr.mxu0 %v261
    %466 = vmatpush1.msra.mxu0 %v260
    %467 = vmatprep.subr.mxu0 %v263
    %468 = vmatpush1.msra.mxu0 %v262
    %469 = vmatprep.subr.mxu0 %v265
    %470 = vmatpush1.msra.mxu0 %v264
    %471 = vmatprep.subr.mxu0 %v267
    %472 = vmatpush1.msra.mxu0 %v266
    %473 = vmatprep.subr.mxu0 %v269
    %474 = vmatpush1.msra.mxu0 %v268
    %475 = vmatprep.subr.mxu0 %v271
    %476 = vmatpush1.msra.mxu0 %v270
    %477 = vmatprep.subr.mxu0 %v273
    %478 = vmatpush1.msra.mxu0 %v272
    %479 = vmatprep.subr.mxu0 %v275
    %480 = vmatpush1.msra.mxu0 %v274
    %481 = vmatprep.subr.mxu0 %v277
    %482 = vmatpush1.msra.mxu0 %v276
    %483 = vmatprep.subr.mxu0 %v279
    %484 = vmatpush1.msra.mxu0 %v278
    %485 = vmatprep.subr.mxu0 %v281
    %486 = vmatpush1.msra.mxu0 %v280
    %487 = vmatprep.subr.mxu0 %v283
    %488 = vmatpush1.msra.mxu0 %v282
    %489 = vmatprep.subr.mxu0 %v285
    %490 = vmatpush1.msra.mxu0 %v284
    %491 = vmatprep.subr.mxu0 %v287
    %492 = vmatpush1.msra.mxu0 %v286
    %493 = vmatprep.subr.mxu0 %v289
    %494 = vmatpush1.msra.mxu0 %v288
    %495 = vmatprep.subr.mxu0 %v291
    %496 = vmatpush1.msra.mxu0 %v290
    %497 = vmatprep.subr.mxu0 %v293
    %498 = vmatpush1.msra.mxu0 %v292
    %499 = vmatprep.subr.mxu0 %v295
    %500 = vmatpush1.msra.mxu0 %v294
    %501 = vmatprep.subr.mxu0 %v297
    %502 = vmatpush1.msra.mxu0 %v296
    %503 = vmatprep.mubr.f32.mxu0 %v134
    %504 = vmatmul.mubr.f32.gmra.mrb[0].mxu0 %v131
    %v505 = vpop.f32.mrb[0].mxu0
    %v506 = vadd.f32 %v429, %v505
    %v507 = vpop.f32.mrb[0].mxu0
    %v508 = vadd.f32 %v431, %v507
    %509 = vmatprep.mubr.f32.mxu0 %v140
    %510 = vmatmul.mubr.f32.gmra.mrb[0].mxu0 %v137
    %v511 = vpop.f32.mrb[0].mxu0
    %v512 = vadd.f32 %v435, %v511
    %v513 = vpop.f32.mrb[0].mxu0
    %v514 = vadd.f32 %v437, %v513
    %515 = vdwg.mxu0
    %516 = vmatprep.subr.mxu0 %v299
    %517 = vmatpush1.msra.mxu0 %v298
    %518 = vmatprep.subr.mxu0 %v301
    %519 = vmatpush1.msra.mxu0 %v300
    %520 = vmatprep.subr.mxu0 %v303
    %521 = vmatpush1.msra.mxu0 %v302
    %522 = vmatprep.subr.mxu0 %v305
    %523 = vmatpush1.msra.mxu0 %v304
    %524 = vmatprep.subr.mxu0 %v307
    %525 = vmatpush1.msra.mxu0 %v306
    %526 = vmatprep.subr.mxu0 %v309
    %527 = vmatpush1.msra.mxu0 %v308
    %528 = vmatprep.subr.mxu0 %v311
    %529 = vmatpush1.msra.mxu0 %v310
    %530 = vmatprep.subr.mxu0 %v313
    %531 = vmatpush1.msra.mxu0 %v312
    %532 = vmatprep.subr.mxu0 %v315
    %533 = vmatpush1.msra.mxu0 %v314
    %534 = vmatprep.subr.mxu0 %v317
    %535 = vmatpush1.msra.mxu0 %v316
    %536 = vmatprep.subr.mxu0 %v319
    %537 = vmatpush1.msra.mxu0 %v318
    %538 = vmatprep.subr.mxu0 %v321
    %539 = vmatpush1.msra.mxu0 %v320
    %540 = vmatprep.subr.mxu0 %v323
    %541 = vmatpush1.msra.mxu0 %v322
    %542 = vmatprep.subr.mxu0 %v325
    %543 = vmatpush1.msra.mxu0 %v324
    %544 = vmatprep.subr.mxu0 %v327
    %545 = vmatpush1.msra.mxu0 %v326
    %546 = vmatprep.subr.mxu0 %v329
    %547 = vmatpush1.msra.mxu0 %v328
    %548 = vmatprep.subr.mxu0 %v331
    %549 = vmatpush1.msra.mxu0 %v330
    %550 = vmatprep.subr.mxu0 %v333
    %551 = vmatpush1.msra.mxu0 %v332
    %552 = vmatprep.subr.mxu0 %v335
    %553 = vmatpush1.msra.mxu0 %v334
    %554 = vmatprep.subr.mxu0 %v337
    %555 = vmatpush1.msra.mxu0 %v336
    %556 = vmatprep.subr.mxu0 %v339
    %557 = vmatpush1.msra.mxu0 %v338
    %558 = vmatprep.subr.mxu0 %v341
    %559 = vmatpush1.msra.mxu0 %v340
    %560 = vmatprep.subr.mxu0 %v343
    %561 = vmatpush1.msra.mxu0 %v342
    %562 = vmatprep.subr.mxu0 %v345
    %563 = vmatpush1.msra.mxu0 %v344
    %564 = vmatprep.subr.mxu0 %v347
    %565 = vmatpush1.msra.mxu0 %v346
    %566 = vmatprep.subr.mxu0 %v349
    %567 = vmatpush1.msra.mxu0 %v348
    %568 = vmatprep.subr.mxu0 %v351
    %569 = vmatpush1.msra.mxu0 %v350
    %570 = vmatprep.subr.mxu0 %v353
    %571 = vmatpush1.msra.mxu0 %v352
    %572 = vmatprep.subr.mxu0 %v355
    %573 = vmatpush1.msra.mxu0 %v354
    %574 = vmatprep.subr.mxu0 %v357
    %575 = vmatpush1.msra.mxu0 %v356
    %576 = vmatprep.subr.mxu0 %v359
    %577 = vmatpush1.msra.mxu0 %v358
    %578 = vmatprep.subr.mxu0 %v361
    %579 = vmatpush1.msra.mxu0 %v360
    %580 = vmatprep.mubr.f32.mxu0 %v159
    %581 = vmatmul.mubr.f32.gmra.mrb[0].mxu0 %v156
    %v582 = vpop.f32.mrb[0].mxu0
    %v583 = vadd.f32 %v506, %v582
    %v584 = vpop.f32.mrb[0].mxu0
    %v585 = vadd.f32 %v508, %v584
    %586 = vmatprep.mubr.f32.mxu0 %v165
    %587 = vmatmul.mubr.f32.gmra.mrb[0].mxu0 %v162
    %v588 = vpop.f32.mrb[0].mxu0
    %v589 = vadd.f32 %v512, %v588
    %v590 = vpop.f32.mrb[0].mxu0
    %v591 = vadd.f32 %v514, %v590
    %592 = vdwg.mxu0
    %v593 = vmul.f32 %v583, %v583
    %v594 = vmul.f32 %v585, %v585
    %v595 = vmul.f32 %v589, %v589
    %v596 = vmul.f32 %v591, %v591
    %v597 = vld [vmem:[%s7] sm:$0xff]
    %v598 = vld [vmem:[%s7 + $0x8] sm:$0xff]
    %v599 = vld [vmem:[%s7 + $0x10] sm:$0xff]
    %v600 = vld [vmem:[%s7 + $0x18] sm:$0xff]
    %v601 = vld [vmem:[%s7 + $0x20] sm:$0xff]
    %v602 = vld [vmem:[%s7 + $0x28] sm:$0xff]
    %v603 = vld [vmem:[%s7 + $0x30] sm:$0xff]
    %v604 = vld [vmem:[%s7 + $0x38] sm:$0xff]
    %v605 = vld [vmem:[%s7 + $0x40] sm:$0xff]
    %v606 = vld [vmem:[%s7 + $0x48] sm:$0xff]
    %v607 = vld [vmem:[%s7 + $0x50] sm:$0xff]
    %v608 = vld [vmem:[%s7 + $0x58] sm:$0xff]
    %v609 = vld [vmem:[%s7 + $0x60] sm:$0xff]
    %v610 = vld [vmem:[%s7 + $0x68] sm:$0xff]
    %v611 = vld [vmem:[%s7 + $0x70] sm:$0xff]
    %v612 = vld [vmem:[%s7 + $0x78] sm:$0xff]
    %v613 = vld [vmem:[%s7 + $0x80] sm:$0xff]
    %v614 = vld [vmem:[%s7 + $0x88] sm:$0xff]
    %v615 = vld [vmem:[%s7 + $0x90] sm:$0xff]
    %v616 = vld [vmem:[%s7 + $0x98] sm:$0xff]
    %v617 = vld [vmem:[%s7 + $0xa0] sm:$0xff]
    %v618 = vld [vmem:[%s7 + $0xa8] sm:$0xff]
    %v619 = vld [vmem:[%s7 + $0xb0] sm:$0xff]
    %v620 = vld [vmem:[%s7 + $0xb8] sm:$0xff]
    %v621 = vld [vmem:[%s7 + $0xc0] sm:$0xff]
    %v622 = vld [vmem:[%s7 + $0xc8] sm:$0xff]
    %v623 = vld [vmem:[%s7 + $0xd0] sm:$0xff]
    %v624 = vld [vmem:[%s7 + $0xd8] sm:$0xff]
    %v625 = vld [vmem:[%s7 + $0xe0] sm:$0xff]
    %v626 = vld [vmem:[%s7 + $0xe8] sm:$0xff]
    %v627 = vld [vmem:[%s7 + $0xf0] sm:$0xff]
    %v628 = vld [vmem:[%s7 + $0xf8] sm:$0xff]
    %629 = vmatprep.subr.mxu0 0.0
    %630 = vmatpush1.msra.mxu0 %v597
    %631 = vmatprep.subr.mxu0 0.0
    %632 = vmatpush1.msra.mxu0 %v598
    %633 = vmatprep.subr.mxu0 0.0
    %634 = vmatpush1.msra.mxu0 %v599
    %635 = vmatprep.subr.mxu0 0.0
    %636 = vmatpush1.msra.mxu0 %v600
    %637 = vmatprep.subr.mxu0 0.0
    %638 = vmatpush1.msra.mxu0 %v601
    %639 = vmatprep.subr.mxu0 0.0
    %640 = vmatpush1.msra.mxu0 %v602
    %641 = vmatprep.subr.mxu0 0.0
    %642 = vmatpush1.msra.mxu0 %v603
    %643 = vmatprep.subr.mxu0 0.0
    %644 = vmatpush1.msra.mxu0 %v604
    %645 = vmatprep.subr.mxu0 0.0
    %646 = vmatpush1.msra.mxu0 %v605
    %647 = vmatprep.subr.mxu0 0.0
    %648 = vmatpush1.msra.mxu0 %v606
    %649 = vmatprep.subr.mxu0 0.0
    %650 = vmatpush1.msra.mxu0 %v607
    %651 = vmatprep.subr.mxu0 0.0
    %652 = vmatpush1.msra.mxu0 %v608
    %653 = vmatprep.subr.mxu0 0.0
    %654 = vmatpush1.msra.mxu0 %v609
    %655 = vmatprep.subr.mxu0 0.0
    %656 = vmatpush1.msra.mxu0 %v610
    %657 = vmatprep.subr.mxu0 0.0
    %658 = vmatpush1.msra.mxu0 %v611
    %659 = vmatprep.subr.mxu0 0.0
    %660 = vmatpush1.msra.mxu0 %v612
    %661 = vmatprep.subr.mxu0 0.0
    %662 = vmatpush1.msra.mxu0 %v613
    %663 = vmatprep.subr.mxu0 0.0
    %664 = vmatpush1.msra.mxu0 %v614
    %665 = vmatprep.subr.mxu0 0.0
    %666 = vmatpush1.msra.mxu0 %v615
    %667 = vmatprep.subr.mxu0 0.0
    %668 = vmatpush1.msra.mxu0 %v616
    %669 = vmatprep.subr.mxu0 0.0
    %670 = vmatpush1.msra.mxu0 %v617
    %671 = vmatprep.subr.mxu0 0.0
    %672 = vmatpush1.msra.mxu0 %v618
    %673 = vmatprep.subr.mxu0 0.0
    %674 = vmatpush1.msra.mxu0 %v619
    %675 = vmatprep.subr.mxu0 0.0
    %676 = vmatpush1.msra.mxu0 %v620
    %677 = vmatprep.subr.mxu0 0.0
    %678 = vmatpush1.msra.mxu0 %v621
    %679 = vmatprep.subr.mxu0 0.0
    %680 = vmatpush1.msra.mxu0 %v622
    %681 = vmatprep.subr.mxu0 0.0
    %682 = vmatpush1.msra.mxu0 %v623
    %683 = vmatprep.subr.mxu0 0.0
    %684 = vmatpush1.msra.mxu0 %v624
    %685 = vmatprep.subr.mxu0 0.0
    %686 = vmatpush1.msra.mxu0 %v625
    %687 = vmatprep.subr.mxu0 0.0
    %688 = vmatpush1.msra.mxu0 %v626
    %689 = vmatprep.subr.mxu0 0.0
    %690 = vmatpush1.msra.mxu0 %v627
    %691 = vmatprep.subr.mxu0 0.0
    %692 = vmatpush1.msra.mxu0 %v628
    %693 = vmatprep.mubr.f32.mxu0 %v585
    %694 = vmatmul.mubr.f32.gmra.mrb[0].mxu0 %v583
    %v695 = vpop.f32.mrb[0].mxu0
    %v696 = vadd.f32 0.0, %v695
    %v697 = vpop.f32.mrb[0].mxu0
    %698 = vmatprep.mubr.f32.mxu0 %v591
    %699 = vmatmul.mubr.f32.gmra.mrb[0].mxu0 %v589
    %v700 = vpop.f32.mrb[0].mxu0
    %v701 = vadd.f32 0.0, %v700
    %v702 = vpop.f32.mrb[0].mxu0
    %703 = vmatprep.mubr.f32.mxu0 %v594
    %704 = vmatmul.mubr.f32.gmra.mrb[0].mxu0 %v593
    %v705 = vpop.f32.mrb[0].mxu0
    %v706 = vadd.f32 0.0, %v705
    %v707 = vpop.f32.mrb[0].mxu0
    %708 = vmatprep.mubr.f32.mxu0 %v596
    %709 = vmatmul.mubr.f32.gmra.mrb[0].mxu0 %v595
    %v710 = vpop.f32.mrb[0].mxu0
    %v711 = vadd.f32 0.0, %v710
    %v712 = vpop.f32.mrb[0].mxu0
    %713 = vdwg.mxu0
    %vm714 = vcmask 261120
    %v715 = vsel %vm714, %v696, 0.0
    %v716 = vsel %vm714, %v701, 0.0
    %v717 = vadd.f32 %v715, %v716
    %v718 = vrot.slane %v717, 4
    %v719 = vadd.f32 %v717, %v718
    %v720 = vrot.slane %v719, 2
    %v721 = vadd.f32 %v719, %v720
    %v722 = vrot.slane %v721, 1
    %v723 = vadd.f32 %v721, %v722
    %v724 = vsel %vm714, %v706, 0.0
    %v725 = vsel %vm714, %v711, 0.0
    %v726 = vadd.f32 %v724, %v725
    %v727 = vrot.slane %v726, 4
    %v728 = vadd.f32 %v726, %v727
    %v729 = vrot.slane %v728, 2
    %v730 = vadd.f32 %v728, %v729
    %v731 = vrot.slane %v730, 1
    %v732 = vadd.f32 %v730, %v731
    %v733 = vmul.f32 %v723, 0.0078125
    %v734 = vmul.f32 %v732, 0.0078125
    %v735 = vmul.f32 %v733, %v733
    %v736 = vsub.f32 %v734, %v735
    %v737 = vadd.f32 %v736, 1e-05
    %v738 = vrsqrt.pop %v737
    %vm739 = vcmask 1040384
    %v740 = vsel %vm739, %v738, %v733
    %v741 = vld [vmem:[%s8] sm:$0xff]
    %v742 = vld [vmem:[%s8 + $0x8] sm:$0xff]
    %v743 = vld [vmem:[%s8 + $0x10] sm:$0xff]
    %v744 = vld [vmem:[%s8 + $0x18] sm:$0xff]
    %v745 = vld [vmem:[%s8 + $0x20] sm:$0xff]
    %v746 = vld [vmem:[%s8 + $0x28] sm:$0xff]
    %v747 = vld [vmem:[%s8 + $0x30] sm:$0xff]
    %v748 = vld [vmem:[%s8 + $0x38] sm:$0xff]
    %v750 = vsel %vm714, %v740, 0
    %752 = vmatprep.subr.mxu0 %v742
    %753 = vmatpush1.msra.mxu0 %v741
    %754 = vmatprep.subr.mxu0 %v744
    %755 = vmatpush1.msra.mxu0 %v743
    %756 = vmatprep.subr.mxu0 %v746
    %757 = vmatpush1.msra.mxu0 %v745
    %758 = vmatprep.subr.mxu0 %v748
    %759 = vmatpush1.msra.mxu0 %v747
    %760 = vmatprep.subr.mxu0 0.0
    %761 = vmatpush1.msra.mxu0 0.0
    %762 = vmatprep.subr.mxu0 0.0
    %763 = vmatpush1.msra.mxu0 0.0
    %764 = vmatprep.subr.mxu0 0.0
    %765 = vmatpush1.msra.mxu0 0.0
    %766 = vmatprep.subr.mxu0 0.0
    %767 = vmatpush1.msra.mxu0 0.0
    %768 = vmatprep.subr.mxu0 0.0
    %769 = vmatpush1.msra.mxu0 0.0
    %770 = vmatprep.subr.mxu0 0.0
    %771 = vmatpush1.msra.mxu0 0.0
    %772 = vmatprep.subr.mxu0 0.0
    %773 = vmatpush1.msra.mxu0 0.0
    %774 = vmatprep.subr.mxu0 0.0
    %775 = vmatpush1.msra.mxu0 0.0
    %776 = vmatprep.subr.mxu0 0.0
    %777 = vmatpush1.msra.mxu0 0.0
    %778 = vmatprep.subr.mxu0 0.0
    %779 = vmatpush1.msra.mxu0 0.0
    %780 = vmatprep.subr.mxu0 0.0
    %781 = vmatpush1.msra.mxu0 0.0
    %782 = vmatprep.subr.mxu0 0.0
    %783 = vmatpush1.msra.mxu0 0.0
    %784 = vmatprep.subr.mxu0 0.0
    %785 = vmatpush1.msra.mxu0 0.0
    %786 = vmatprep.subr.mxu0 0.0
    %787 = vmatpush1.msra.mxu0 0.0
    %788 = vmatprep.subr.mxu0 0.0
    %789 = vmatpush1.msra.mxu0 0.0
    %790 = vmatprep.subr.mxu0 0.0
    %791 = vmatpush1.msra.mxu0 0.0
    %792 = vmatprep.subr.mxu0 0.0
    %793 = vmatpush1.msra.mxu0 0.0
    %794 = vmatprep.subr.mxu0 0.0
    %795 = vmatpush1.msra.mxu0 0.0
    %796 = vmatprep.subr.mxu0 0.0
    %797 = vmatpush1.msra.mxu0 0.0
    %798 = vmatprep.subr.mxu0 0.0
    %799 = vmatpush1.msra.mxu0 0.0
    %800 = vmatprep.subr.mxu0 0.0
    %801 = vmatpush1.msra.mxu0 0.0
    %802 = vmatprep.subr.mxu0 0.0
    %803 = vmatpush1.msra.mxu0 0.0
    %804 = vmatprep.subr.mxu0 0.0
    %805 = vmatpush1.msra.mxu0 0.0
    %806 = vmatprep.subr.mxu0 0.0
    %807 = vmatpush1.msra.mxu0 0.0
    %808 = vmatprep.subr.mxu0 0.0
    %809 = vmatpush1.msra.mxu0 0.0
    %810 = vmatprep.subr.mxu0 0.0
    %811 = vmatpush1.msra.mxu0 0.0
    %812 = vmatprep.subr.mxu0 0.0
    %813 = vmatpush1.msra.mxu0 0.0
    %814 = vmatprep.subr.mxu0 0.0
    %815 = vmatpush1.msra.mxu0 0.0
    %816 = vmatprep.mubr.f32.mxu0 0.0
    %817 = vmatmul.mubr.f32.gmra.mrb[0].mxu0 %v750
    %v818 = vpop.f32.mrb[0].mxu0
    %v819 = vadd.f32 0.0, %v818
    %v820 = vpop.f32.mrb[0].mxu0
    %v821 = vadd.f32 0.0, %v820
    %822 = vdwg.mxu0
    %v823 = vld [vmem:[%s2] sm:$0x3]
    %v825 = vlaneseq
    %v826 = vshrl.u32 %v825, 7
    %v827 = vsub.s32 0, %v826
    %v828 = vrot.slane %v823, %v827
    %v829 = vlaneseq
    %v830 = vshrl.u32 %v829, 7
    %v831 = vsub.s32 1, %v830
    %v832 = vrot.slane %v823, %v831
    %v835 = vmul.f32 %v819, %v828
    %v836 = vmul.f32 %v821, %v832
    %v837 = vld [vmem:[%s3] sm:$0x3]
    %v840 = vrot.slane %v835, 7
    %v841 = vrot.slane %v836, 7
    %v844 = vmul.f32 %v819, %v840
    %v845 = vmul.f32 %v821, %v841
    %v848 = vcombine.low %v844, %v845
    %v850 = vunpack.c.l.s4 1966171168
    %v851 = vunpack.c.0.s8 %v850
    %v852 = vlaneseq
    %v853 = vshrl.u32 %v852, 7
    %v854 = vsub.s32 %v851, %v853
    %v855 = vrot.slane %v848, %v854
    %v856 = vcombine.high %v855, %v855
    %v858 = vunpack.c.l.s4 1966171168
    %v859 = vunpack.c.0.s8 %v858
    %v860 = vlaneseq
    %v861 = vshrl.u32 %v860, 7
    %v862 = vsub.s32 %v859, %v861
    %v863 = vrot.slane %v856, %v862
    %v865 = vsub.f32 %v837, %v863
    %v866 = vlaneseq
    %v867 = vshrl.u32 %v866, 7
    %v868 = vsub.s32 0, %v867
    %v869 = vrot.slane %v835, %v868
    %v870 = vlaneseq
    %v871 = vshrl.u32 %v870, 7
    %v872 = vsub.s32 0, %v871
    %v873 = vrot.slane %v836, %v872
    %v874 = vmul.f32 %v583, %v869
    %v875 = vmul.f32 %v585, %v873
    %v876 = vmul.f32 %v589, %v869
    %v877 = vmul.f32 %v591, %v873
    %v879 = vlaneseq
    %v880 = vshrl.u32 %v879, 7
    %v881 = vsub.s32 0, %v880
    %v882 = vrot.slane %v865, %v881
    %v883 = vlaneseq
    %v884 = vshrl.u32 %v883, 7
    %v885 = vsub.s32 1, %v884
    %v886 = vrot.slane %v865, %v885
    %v889 = vadd.f32 %v874, %v882
    %v890 = vadd.f32 %v875, %v886
    %v891 = vadd.f32 %v876, %v882
    %v892 = vadd.f32 %v877, %v886
    %v893 = vmax.f32 %v889, 0.0
    %v894 = vmax.f32 %v890, 0.0
    %v895 = vmax.f32 %v891, 0.0
    %v896 = vmax.f32 %v892, 0.0
    %v897 = vld [vmem:[%s0] sm:$0xff]
    %v898 = vld [vmem:[%s0 + $0x8] sm:$0xff]
    %v899 = vld [vmem:[%s0 + $0x10] sm:$0xff]
    %v900 = vld [vmem:[%s0 + $0x18] sm:$0xff]
    %v905 = vrot.slane %v893, 7
    %v906 = vrot.slane %v894, 7
    %v907 = vrot.slane %v895, 7
    %v908 = vrot.slane %v896, 7
    %913 = vst [vmem:[#allocation2] sm:$0xfe] %v905
    %914 = vst [vmem:[#allocation2 + $0x8] sm:$0xfe] %v906
    %915 = vst [vmem:[#allocation2 + $0x10] sm:$0x1] %v905
    %916 = vst [vmem:[#allocation2 + $0x18] sm:$0x1] %v906
    %917 = vst [vmem:[#allocation2 + $0x20] sm:$0xfe] %v907
    %918 = vst [vmem:[#allocation2 + $0x28] sm:$0xfe] %v908
    %919 = vst [vmem:[#allocation2 + $0x30] sm:$0x1] %v907
    %920 = vst [vmem:[#allocation2 + $0x38] sm:$0x1] %v908
    %v921 = vld [vmem:[#allocation2] sm:$0xff]
    %v922 = vld [vmem:[#allocation2 + $0x8] sm:$0xff]
    %v923 = vld [vmem:[#allocation2 + $0x20] sm:$0xff]
    %v924 = vld [vmem:[#allocation2 + $0x28] sm:$0xff]
    %v925 = vld [vmem:[#allocation2] sm:$0xfe]
    %v926 = vld [vmem:[#allocation2 + $0x8] sm:$0xfe]
    %v927 = vld [vmem:[#allocation2 + $0x10] sm:$0x1]
    %v928 = vld [vmem:[#allocation2 + $0x18] sm:$0x1]
    %v929 = vld [vmem:[#allocation2 + $0x20] sm:$0xfe]
    %v930 = vld [vmem:[#allocation2 + $0x28] sm:$0xfe]
    %v931 = vld [vmem:[#allocation2 + $0x30] sm:$0x1]
    %v932 = vld [vmem:[#allocation2 + $0x38] sm:$0x1]
    %v933 = vld [vmem:[#allocation2] sm:$0xfc]
    %v934 = vld [vmem:[#allocation2 + $0x8] sm:$0xfc]
    %v935 = vld [vmem:[#allocation2 + $0x10] sm:$0x3]
    %v936 = vld [vmem:[#allocation2 + $0x18] sm:$0x3]
    %v937 = vld [vmem:[#allocation2 + $0x20] sm:$0xfc]
    %v938 = vld [vmem:[#allocation2 + $0x28] sm:$0xfc]
    %v939 = vld [vmem:[#allocation2 + $0x30] sm:$0x3]
    %v940 = vld [vmem:[#allocation2 + $0x38] sm:$0x3]
    %v949 = vrot.slane %v925, 1
    %v950 = vrot.slane %v927, 1
    %v951 = vsel %vm128, %v949, %v950
    %v952 = vrot.slane %v926, 1
    %v953 = vrot.slane %v928, 1
    %v954 = vsel %vm128, %v952, %v953
    %v955 = vrot.slane %v929, 1
    %v956 = vrot.slane %v931, 1
    %v957 = vsel %vm128, %v955, %v956
    %v958 = vrot.slane %v930, 1
    %v959 = vrot.slane %v932, 1
    %v960 = vsel %vm128, %v958, %v959
    %v973 = vrot.slane %v933, 2
    %v974 = vrot.slane %v935, 2
    %v975 = vsel %vm153, %v973, %v974
    %v976 = vrot.slane %v934, 2
    %v977 = vrot.slane %v936, 2
    %v978 = vsel %vm153, %v976, %v977
    %v979 = vrot.slane %v937, 2
    %v980 = vrot.slane %v939, 2
    %v981 = vsel %vm153, %v979, %v980
    %v982 = vrot.slane %v938, 2
    %v983 = vrot.slane %v940, 2
    %v984 = vsel %vm153, %v982, %v983
    %v989 = vld [vmem:[#allocation6] sm:$0xff]
    %v990 = vld [vmem:[#allocation6 + $0x8] sm:$0xff]
    %v991 = vld [vmem:[#allocation6 + $0x10] sm:$0xff]
    %v992 = vld [vmem:[#allocation6 + $0x18] sm:$0xff]
    %v993 = vld [vmem:[#allocation6 + $0x20] sm:$0xff]
    %v994 = vld [vmem:[#allocation6 + $0x28] sm:$0xff]
    %v995 = vld [vmem:[#allocation6 + $0x30] sm:$0xff]
    %v996 = vld [vmem:[#allocation6 + $0x38] sm:$0xff]
    %v997 = vld [vmem:[#allocation6 + $0x40] sm:$0xff]
    %v998 = vld [vmem:[#allocation6 + $0x48] sm:$0xff]
    %v999 = vld [vmem:[#allocation6 + $0x50] sm:$0xff]
    %v1000 = vld [vmem:[#allocation6 + $0x58] sm:$0xff]
    %v1001 = vld [vmem:[#allocation6 + $0x60] sm:$0xff]
    %v1002 = vld [vmem:[#allocation6 + $0x68] sm:$0xff]
    %v1003 = vld [vmem:[#allocation6 + $0x70] sm:$0xff]
    %v1004 = vld [vmem:[#allocation6 + $0x78] sm:$0xff]
    %v1005 = vld [vmem:[#allocation6 + $0x80] sm:$0xff]
    %v1006 = vld [vmem:[#allocation6 + $0x88] sm:$0xff]
    %v1007 = vld [vmem:[#allocation6 + $0x90] sm:$0xff]
    %v1008 = vld [vmem:[#allocation6 + $0x98] sm:$0xff]
    %v1009 = vld [vmem:[#allocation6 + $0xa0] sm:$0xff]
    %v1010 = vld [vmem:[#allocation6 + $0xa8] sm:$0xff]
    %v1011 = vld [vmem:[#allocation6 + $0xb0] sm:$0xff]
    %v1012 = vld [vmem:[#allocation6 + $0xb8] sm:$0xff]
    %v1013 = vld [vmem:[#allocation6 + $0xc0] sm:$0xff]
    %v1014 = vld [vmem:[#allocation6 + $0xc8] sm:$0xff]
    %v1015 = vld [vmem:[#allocation6 + $0xd0] sm:$0xff]
    %v1016 = vld [vmem:[#allocation6 + $0xd8] sm:$0xff]
    %v1017 = vld [vmem:[#allocation6 + $0xe0] sm:$0xff]
    %v1018 = vld [vmem:[#allocation6 + $0xe8] sm:$0xff]
    %v1019 = vld [vmem:[#allocation6 + $0xf0] sm:$0xff]
    %v1020 = vld [vmem:[#allocation6 + $0xf8] sm:$0xff]
    %v1021 = vld [vmem:[#allocation6 + $0x100] sm:$0xff]
    %v1022 = vld [vmem:[#allocation6 + $0x108] sm:$0xff]
    %v1023 = vld [vmem:[#allocation6 + $0x110] sm:$0xff]
    %v1024 = vld [vmem:[#allocation6 + $0x118] sm:$0xff]
    %v1025 = vld [vmem:[#allocation6 + $0x120] sm:$0xff]
    %v1026 = vld [vmem:[#allocation6 + $0x128] sm:$0xff]
    %v1027 = vld [vmem:[#allocation6 + $0x130] sm:$0xff]
    %v1028 = vld [vmem:[#allocation6 + $0x138] sm:$0xff]
    %v1029 = vld [vmem:[#allocation6 + $0x140] sm:$0xff]
    %v1030 = vld [vmem:[#allocation6 + $0x148] sm:$0xff]
    %v1031 = vld [vmem:[#allocation6 + $0x150] sm:$0xff]
    %v1032 = vld [vmem:[#allocation6 + $0x158] sm:$0xff]
    %v1033 = vld [vmem:[#allocation6 + $0x160] sm:$0xff]
    %v1034 = vld [vmem:[#allocation6 + $0x168] sm:$0xff]
    %v1035 = vld [vmem:[#allocation6 + $0x170] sm:$0xff]
    %v1036 = vld [vmem:[#allocation6 + $0x178] sm:$0xff]
    %v1037 = vld [vmem:[#allocation6 + $0x180] sm:$0xff]
    %v1038 = vld [vmem:[#allocation6 + $0x188] sm:$0xff]
    %v1039 = vld [vmem:[#allocation6 + $0x190] sm:$0xff]
    %v1040 = vld [vmem:[#allocation6 + $0x198] sm:$0xff]
    %v1041 = vld [vmem:[#allocation6 + $0x1a0] sm:$0xff]
    %v1042 = vld [vmem:[#allocation6 + $0x1a8] sm:$0xff]
    %v1043 = vld [vmem:[#allocation6 + $0x1b0] sm:$0xff]
    %v1044 = vld [vmem:[#allocation6 + $0x1b8] sm:$0xff]
    %v1045 = vld [vmem:[#allocation6 + $0x1c0] sm:$0xff]
    %v1046 = vld [vmem:[#allocation6 + $0x1c8] sm:$0xff]
    %v1047 = vld [vmem:[#allocation6 + $0x1d0] sm:$0xff]
    %v1048 = vld [vmem:[#allocation6 + $0x1d8] sm:$0xff]
    %v1049 = vld [vmem:[#allocation6 + $0x1e0] sm:$0xff]
    %v1050 = vld [vmem:[#allocation6 + $0x1e8] sm:$0xff]
    %v1051 = vld [vmem:[#allocation6 + $0x1f0] sm:$0xff]
    %v1052 = vld [vmem:[#allocation6 + $0x1f8] sm:$0xff]
    %v1053 = vld [vmem:[#allocation6 + $0x200] sm:$0xff]
    %v1054 = vld [vmem:[#allocation6 + $0x208] sm:$0xff]
    %v1055 = vld [vmem:[#allocation6 + $0x210] sm:$0xff]
    %v1056 = vld [vmem:[#allocation6 + $0x218] sm:$0xff]
    %v1057 = vld [vmem:[#allocation6 + $0x220] sm:$0xff]
    %v1058 = vld [vmem:[#allocation6 + $0x228] sm:$0xff]
    %v1059 = vld [vmem:[#allocation6 + $0x230] sm:$0xff]
    %v1060 = vld [vmem:[#allocation6 + $0x238] sm:$0xff]
    %v1061 = vld [vmem:[#allocation6 + $0x240] sm:$0xff]
    %v1062 = vld [vmem:[#allocation6 + $0x248] sm:$0xff]
    %v1063 = vld [vmem:[#allocation6 + $0x250] sm:$0xff]
    %v1064 = vld [vmem:[#allocation6 + $0x258] sm:$0xff]
    %v1065 = vld [vmem:[#allocation6 + $0x260] sm:$0xff]
    %v1066 = vld [vmem:[#allocation6 + $0x268] sm:$0xff]
    %v1067 = vld [vmem:[#allocation6 + $0x270] sm:$0xff]
    %v1068 = vld [vmem:[#allocation6 + $0x278] sm:$0xff]
    %v1069 = vld [vmem:[#allocation6 + $0x280] sm:$0xff]
    %v1070 = vld [vmem:[#allocation6 + $0x288] sm:$0xff]
    %v1071 = vld [vmem:[#allocation6 + $0x290] sm:$0xff]
    %v1072 = vld [vmem:[#allocation6 + $0x298] sm:$0xff]
    %v1073 = vld [vmem:[#allocation6 + $0x2a0] sm:$0xff]
    %v1074 = vld [vmem:[#allocation6 + $0x2a8] sm:$0xff]
    %v1075 = vld [vmem:[#allocation6 + $0x2b0] sm:$0xff]
    %v1076 = vld [vmem:[#allocation6 + $0x2b8] sm:$0xff]
    %v1077 = vld [vmem:[#allocation6 + $0x2c0] sm:$0xff]
    %v1078 = vld [vmem:[#allocation6 + $0x2c8] sm:$0xff]
    %v1079 = vld [vmem:[#allocation6 + $0x2d0] sm:$0xff]
    %v1080 = vld [vmem:[#allocation6 + $0x2d8] sm:$0xff]
    %v1081 = vld [vmem:[#allocation6 + $0x2e0] sm:$0xff]
    %v1082 = vld [vmem:[#allocation6 + $0x2e8] sm:$0xff]
    %v1083 = vld [vmem:[#allocation6 + $0x2f0] sm:$0xff]
    %v1084 = vld [vmem:[#allocation6 + $0x2f8] sm:$0xff]
    %v1085 = vld [vmem:[#allocation6 + $0x300] sm:$0xff]
    %v1086 = vld [vmem:[#allocation6 + $0x308] sm:$0xff]
    %v1087 = vld [vmem:[#allocation6 + $0x310] sm:$0xff]
    %v1088 = vld [vmem:[#allocation6 + $0x318] sm:$0xff]
    %v1089 = vld [vmem:[#allocation6 + $0x320] sm:$0xff]
    %v1090 = vld [vmem:[#allocation6 + $0x328] sm:$0xff]
    %v1091 = vld [vmem:[#allocation6 + $0x330] sm:$0xff]
    %v1092 = vld [vmem:[#allocation6 + $0x338] sm:$0xff]
    %v1093 = vld [vmem:[#allocation6 + $0x340] sm:$0xff]
    %v1094 = vld [vmem:[#allocation6 + $0x348] sm:$0xff]
    %v1095 = vld [vmem:[#allocation6 + $0x350] sm:$0xff]
    %v1096 = vld [vmem:[#allocation6 + $0x358] sm:$0xff]
    %v1097 = vld [vmem:[#allocation6 + $0x360] sm:$0xff]
    %v1098 = vld [vmem:[#allocation6 + $0x368] sm:$0xff]
    %v1099 = vld [vmem:[#allocation6 + $0x370] sm:$0xff]
    %v1100 = vld [vmem:[#allocation6 + $0x378] sm:$0xff]
    %v1101 = vld [vmem:[#allocation6 + $0x380] sm:$0xff]
    %v1102 = vld [vmem:[#allocation6 + $0x388] sm:$0xff]
    %v1103 = vld [vmem:[#allocation6 + $0x390] sm:$0xff]
    %v1104 = vld [vmem:[#allocation6 + $0x398] sm:$0xff]
    %v1105 = vld [vmem:[#allocation6 + $0x3a0] sm:$0xff]
    %v1106 = vld [vmem:[#allocation6 + $0x3a8] sm:$0xff]
    %v1107 = vld [vmem:[#allocation6 + $0x3b0] sm:$0xff]
    %v1108 = vld [vmem:[#allocation6 + $0x3b8] sm:$0xff]
    %v1109 = vld [vmem:[#allocation6 + $0x3c0] sm:$0xff]
    %v1110 = vld [vmem:[#allocation6 + $0x3c8] sm:$0xff]
    %v1111 = vld [vmem:[#allocation6 + $0x3d0] sm:$0xff]
    %v1112 = vld [vmem:[#allocation6 + $0x3d8] sm:$0xff]
    %v1113 = vld [vmem:[#allocation6 + $0x3e0] sm:$0xff]
    %v1114 = vld [vmem:[#allocation6 + $0x3e8] sm:$0xff]
    %v1115 = vld [vmem:[#allocation6 + $0x3f0] sm:$0xff]
    %v1116 = vld [vmem:[#allocation6 + $0x3f8] sm:$0xff]
    %v1117 = vld [vmem:[#allocation6 + $0x400] sm:$0xff]
    %v1118 = vld [vmem:[#allocation6 + $0x408] sm:$0xff]
    %v1119 = vld [vmem:[#allocation6 + $0x410] sm:$0xff]
    %v1120 = vld [vmem:[#allocation6 + $0x418] sm:$0xff]
    %v1121 = vld [vmem:[#allocation6 + $0x420] sm:$0xff]
    %v1122 = vld [vmem:[#allocation6 + $0x428] sm:$0xff]
    %v1123 = vld [vmem:[#allocation6 + $0x430] sm:$0xff]
    %v1124 = vld [vmem:[#allocation6 + $0x438] sm:$0xff]
    %v1125 = vld [vmem:[#allocation6 + $0x440] sm:$0xff]
    %v1126 = vld [vmem:[#allocation6 + $0x448] sm:$0xff]
    %v1127 = vld [vmem:[#allocation6 + $0x450] sm:$0xff]
    %v1128 = vld [vmem:[#allocation6 + $0x458] sm:$0xff]
    %v1129 = vld [vmem:[#allocation6 + $0x460] sm:$0xff]
    %v1130 = vld [vmem:[#allocation6 + $0x468] sm:$0xff]
    %v1131 = vld [vmem:[#allocation6 + $0x470] sm:$0xff]
    %v1132 = vld [vmem:[#allocation6 + $0x478] sm:$0xff]
    %v1133 = vld [vmem:[#allocation6 + $0x480] sm:$0xff]
    %v1134 = vld [vmem:[#allocation6 + $0x488] sm:$0xff]
    %v1135 = vld [vmem:[#allocation6 + $0x490] sm:$0xff]
    %v1136 = vld [vmem:[#allocation6 + $0x498] sm:$0xff]
    %v1137 = vld [vmem:[#allocation6 + $0x4a0] sm:$0xff]
    %v1138 = vld [vmem:[#allocation6 + $0x4a8] sm:$0xff]
    %v1139 = vld [vmem:[#allocation6 + $0x4b0] sm:$0xff]
    %v1140 = vld [vmem:[#allocation6 + $0x4b8] sm:$0xff]
    %v1141 = vld [vmem:[#allocation6 + $0x4c0] sm:$0xff]
    %v1142 = vld [vmem:[#allocation6 + $0x4c8] sm:$0xff]
    %v1143 = vld [vmem:[#allocation6 + $0x4d0] sm:$0xff]
    %v1144 = vld [vmem:[#allocation6 + $0x4d8] sm:$0xff]
    %v1145 = vld [vmem:[#allocation6 + $0x4e0] sm:$0xff]
    %v1146 = vld [vmem:[#allocation6 + $0x4e8] sm:$0xff]
    %v1147 = vld [vmem:[#allocation6 + $0x4f0] sm:$0xff]
    %v1148 = vld [vmem:[#allocation6 + $0x4f8] sm:$0xff]
    %v1149 = vld [vmem:[#allocation6 + $0x500] sm:$0xff]
    %v1150 = vld [vmem:[#allocation6 + $0x508] sm:$0xff]
    %v1151 = vld [vmem:[#allocation6 + $0x510] sm:$0xff]
    %v1152 = vld [vmem:[#allocation6 + $0x518] sm:$0xff]
    %v1153 = vld [vmem:[#allocation6 + $0x520] sm:$0xff]
    %v1154 = vld [vmem:[#allocation6 + $0x528] sm:$0xff]
    %v1155 = vld [vmem:[#allocation6 + $0x530] sm:$0xff]
    %v1156 = vld [vmem:[#allocation6 + $0x538] sm:$0xff]
    %v1157 = vld [vmem:[#allocation6 + $0x540] sm:$0xff]
    %v1158 = vld [vmem:[#allocation6 + $0x548] sm:$0xff]
    %v1159 = vld [vmem:[#allocation6 + $0x550] sm:$0xff]
    %v1160 = vld [vmem:[#allocation6 + $0x558] sm:$0xff]
    %v1161 = vld [vmem:[#allocation6 + $0x560] sm:$0xff]
    %v1162 = vld [vmem:[#allocation6 + $0x568] sm:$0xff]
    %v1163 = vld [vmem:[#allocation6 + $0x570] sm:$0xff]
    %v1164 = vld [vmem:[#allocation6 + $0x578] sm:$0xff]
    %v1165 = vld [vmem:[#allocation6 + $0x580] sm:$0xff]
    %v1166 = vld [vmem:[#allocation6 + $0x588] sm:$0xff]
    %v1167 = vld [vmem:[#allocation6 + $0x590] sm:$0xff]
    %v1168 = vld [vmem:[#allocation6 + $0x598] sm:$0xff]
    %v1169 = vld [vmem:[#allocation6 + $0x5a0] sm:$0xff]
    %v1170 = vld [vmem:[#allocation6 + $0x5a8] sm:$0xff]
    %v1171 = vld [vmem:[#allocation6 + $0x5b0] sm:$0xff]
    %v1172 = vld [vmem:[#allocation6 + $0x5b8] sm:$0xff]
    %v1173 = vld [vmem:[#allocation6 + $0x5c0] sm:$0xff]
    %v1174 = vld [vmem:[#allocation6 + $0x5c8] sm:$0xff]
    %v1175 = vld [vmem:[#allocation6 + $0x5d0] sm:$0xff]
    %v1176 = vld [vmem:[#allocation6 + $0x5d8] sm:$0xff]
    %v1177 = vld [vmem:[#allocation6 + $0x5e0] sm:$0xff]
    %v1178 = vld [vmem:[#allocation6 + $0x5e8] sm:$0xff]
    %v1179 = vld [vmem:[#allocation6 + $0x5f0] sm:$0xff]
    %v1180 = vld [vmem:[#allocation6 + $0x5f8] sm:$0xff]
    %1181 = vmatprep.subr.mxu0 %v990
    %1182 = vmatpush1.msra.mxu0 %v989
    %1183 = vmatprep.subr.mxu0 %v992
    %1184 = vmatpush1.msra.mxu0 %v991
    %1185 = vmatprep.subr.mxu0 %v994
    %1186 = vmatpush1.msra.mxu0 %v993
    %1187 = vmatprep.subr.mxu0 %v996
    %1188 = vmatpush1.msra.mxu0 %v995
    %1189 = vmatprep.subr.mxu0 %v998
    %1190 = vmatpush1.msra.mxu0 %v997
    %1191 = vmatprep.subr.mxu0 %v1000
    %1192 = vmatpush1.msra.mxu0 %v999
    %1193 = vmatprep.subr.mxu0 %v1002
    %1194 = vmatpush1.msra.mxu0 %v1001
    %1195 = vmatprep.subr.mxu0 %v1004
    %1196 = vmatpush1.msra.mxu0 %v1003
    %1197 = vmatprep.subr.mxu0 %v1006
    %1198 = vmatpush1.msra.mxu0 %v1005
    %1199 = vmatprep.subr.mxu0 %v1008
    %1200 = vmatpush1.msra.mxu0 %v1007
    %1201 = vmatprep.subr.mxu0 %v1010
    %1202 = vmatpush1.msra.mxu0 %v1009
    %1203 = vmatprep.subr.mxu0 %v1012
    %1204 = vmatpush1.msra.mxu0 %v1011
    %1205 = vmatprep.subr.mxu0 %v1014
    %1206 = vmatpush1.msra.mxu0 %v1013
    %1207 = vmatprep.subr.mxu0 %v1016
    %1208 = vmatpush1.msra.mxu0 %v1015
    %1209 = vmatprep.subr.mxu0 %v1018
    %1210 = vmatpush1.msra.mxu0 %v1017
    %1211 = vmatprep.subr.mxu0 %v1020
    %1212 = vmatpush1.msra.mxu0 %v1019
    %1213 = vmatprep.subr.mxu0 %v1022
    %1214 = vmatpush1.msra.mxu0 %v1021
    %1215 = vmatprep.subr.mxu0 %v1024
    %1216 = vmatpush1.msra.mxu0 %v1023
    %1217 = vmatprep.subr.mxu0 %v1026
    %1218 = vmatpush1.msra.mxu0 %v1025
    %1219 = vmatprep.subr.mxu0 %v1028
    %1220 = vmatpush1.msra.mxu0 %v1027
    %1221 = vmatprep.subr.mxu0 %v1030
    %1222 = vmatpush1.msra.mxu0 %v1029
    %1223 = vmatprep.subr.mxu0 %v1032
    %1224 = vmatpush1.msra.mxu0 %v1031
    %1225 = vmatprep.subr.mxu0 %v1034
    %1226 = vmatpush1.msra.mxu0 %v1033
    %1227 = vmatprep.subr.mxu0 %v1036
    %1228 = vmatpush1.msra.mxu0 %v1035
    %1229 = vmatprep.subr.mxu0 %v1038
    %1230 = vmatpush1.msra.mxu0 %v1037
    %1231 = vmatprep.subr.mxu0 %v1040
    %1232 = vmatpush1.msra.mxu0 %v1039
    %1233 = vmatprep.subr.mxu0 %v1042
    %1234 = vmatpush1.msra.mxu0 %v1041
    %1235 = vmatprep.subr.mxu0 %v1044
    %1236 = vmatpush1.msra.mxu0 %v1043
    %1237 = vmatprep.subr.mxu0 %v1046
    %1238 = vmatpush1.msra.mxu0 %v1045
    %1239 = vmatprep.subr.mxu0 %v1048
    %1240 = vmatpush1.msra.mxu0 %v1047
    %1241 = vmatprep.subr.mxu0 %v1050
    %1242 = vmatpush1.msra.mxu0 %v1049
    %1243 = vmatprep.subr.mxu0 %v1052
    %1244 = vmatpush1.msra.mxu0 %v1051
    %1245 = vmatprep.mubr.f32.mxu0 %v922
    %1246 = vmatmul.mubr.f32.gmra.mrb[0].mxu0 %v921
    %v1247 = vpop.f32.mrb[0].mxu0
    %v1248 = vadd.f32 0.0, %v1247
    %v1249 = vpop.f32.mrb[0].mxu0
    %v1250 = vadd.f32 0.0, %v1249
    %1251 = vmatprep.mubr.f32.mxu0 %v924
    %1252 = vmatmul.mubr.f32.gmra.mrb[0].mxu0 %v923
    %v1253 = vpop.f32.mrb[0].mxu0
    %v1254 = vadd.f32 0.0, %v1253
    %v1255 = vpop.f32.mrb[0].mxu0
    %v1256 = vadd.f32 0.0, %v1255
    %1257 = vdwg.mxu0
    %1258 = vmatprep.subr.mxu0 %v1054
    %1259 = vmatpush1.msra.mxu0 %v1053
    %1260 = vmatprep.subr.mxu0 %v1056
    %1261 = vmatpush1.msra.mxu0 %v1055
    %1262 = vmatprep.subr.mxu0 %v1058
    %1263 = vmatpush1.msra.mxu0 %v1057
    %1264 = vmatprep.subr.mxu0 %v1060
    %1265 = vmatpush1.msra.mxu0 %v1059
    %1266 = vmatprep.subr.mxu0 %v1062
    %1267 = vmatpush1.msra.mxu0 %v1061
    %1268 = vmatprep.subr.mxu0 %v1064
    %1269 = vmatpush1.msra.mxu0 %v1063
    %1270 = vmatprep.subr.mxu0 %v1066
    %1271 = vmatpush1.msra.mxu0 %v1065
    %1272 = vmatprep.subr.mxu0 %v1068
    %1273 = vmatpush1.msra.mxu0 %v1067
    %1274 = vmatprep.subr.mxu0 %v1070
    %1275 = vmatpush1.msra.mxu0 %v1069
    %1276 = vmatprep.subr.mxu0 %v1072
    %1277 = vmatpush1.msra.mxu0 %v1071
    %1278 = vmatprep.subr.mxu0 %v1074
    %1279 = vmatpush1.msra.mxu0 %v1073
    %1280 = vmatprep.subr.mxu0 %v1076
    %1281 = vmatpush1.msra.mxu0 %v1075
    %1282 = vmatprep.subr.mxu0 %v1078
    %1283 = vmatpush1.msra.mxu0 %v1077
    %1284 = vmatprep.subr.mxu0 %v1080
    %1285 = vmatpush1.msra.mxu0 %v1079
    %1286 = vmatprep.subr.mxu0 %v1082
    %1287 = vmatpush1.msra.mxu0 %v1081
    %1288 = vmatprep.subr.mxu0 %v1084
    %1289 = vmatpush1.msra.mxu0 %v1083
    %1290 = vmatprep.subr.mxu0 %v1086
    %1291 = vmatpush1.msra.mxu0 %v1085
    %1292 = vmatprep.subr.mxu0 %v1088
    %1293 = vmatpush1.msra.mxu0 %v1087
    %1294 = vmatprep.subr.mxu0 %v1090
    %1295 = vmatpush1.msra.mxu0 %v1089
    %1296 = vmatprep.subr.mxu0 %v1092
    %1297 = vmatpush1.msra.mxu0 %v1091
    %1298 = vmatprep.subr.mxu0 %v1094
    %1299 = vmatpush1.msra.mxu0 %v1093
    %1300 = vmatprep.subr.mxu0 %v1096
    %1301 = vmatpush1.msra.mxu0 %v1095
    %1302 = vmatprep.subr.mxu0 %v1098
    %1303 = vmatpush1.msra.mxu0 %v1097
    %1304 = vmatprep.subr.mxu0 %v1100
    %1305 = vmatpush1.msra.mxu0 %v1099
    %1306 = vmatprep.subr.mxu0 %v1102
    %1307 = vmatpush1.msra.mxu0 %v1101
    %1308 = vmatprep.subr.mxu0 %v1104
    %1309 = vmatpush1.msra.mxu0 %v1103
    %1310 = vmatprep.subr.mxu0 %v1106
    %1311 = vmatpush1.msra.mxu0 %v1105
    %1312 = vmatprep.subr.mxu0 %v1108
    %1313 = vmatpush1.msra.mxu0 %v1107
    %1314 = vmatprep.subr.mxu0 %v1110
    %1315 = vmatpush1.msra.mxu0 %v1109
    %1316 = vmatprep.subr.mxu0 %v1112
    %1317 = vmatpush1.msra.mxu0 %v1111
    %1318 = vmatprep.subr.mxu0 %v1114
    %1319 = vmatpush1.msra.mxu0 %v1113
    %1320 = vmatprep.subr.mxu0 %v1116
    %1321 = vmatpush1.msra.mxu0 %v1115
    %1322 = vmatprep.mubr.f32.mxu0 %v954
    %1323 = vmatmul.mubr.f32.gmra.mrb[0].mxu0 %v951
    %v1324 = vpop.f32.mrb[0].mxu0
    %v1325 = vadd.f32 %v1248, %v1324
    %v1326 = vpop.f32.mrb[0].mxu0
    %v1327 = vadd.f32 %v1250, %v1326
    %1328 = vmatprep.mubr.f32.mxu0 %v960
    %1329 = vmatmul.mubr.f32.gmra.mrb[0].mxu0 %v957
    %v1330 = vpop.f32.mrb[0].mxu0
    %v1331 = vadd.f32 %v1254, %v1330
    %v1332 = vpop.f32.mrb[0].mxu0
    %v1333 = vadd.f32 %v1256, %v1332
    %1334 = vdwg.mxu0
    %1335 = vmatprep.subr.mxu0 %v1118
    %1336 = vmatpush1.msra.mxu0 %v1117
    %1337 = vmatprep.subr.mxu0 %v1120
    %1338 = vmatpush1.msra.mxu0 %v1119
    %1339 = vmatprep.subr.mxu0 %v1122
    %1340 = vmatpush1.msra.mxu0 %v1121
    %1341 = vmatprep.subr.mxu0 %v1124
    %1342 = vmatpush1.msra.mxu0 %v1123
    %1343 = vmatprep.subr.mxu0 %v1126
    %1344 = vmatpush1.msra.mxu0 %v1125
    %1345 = vmatprep.subr.mxu0 %v1128
    %1346 = vmatpush1.msra.mxu0 %v1127
    %1347 = vmatprep.subr.mxu0 %v1130
    %1348 = vmatpush1.msra.mxu0 %v1129
    %1349 = vmatprep.subr.mxu0 %v1132
    %1350 = vmatpush1.msra.mxu0 %v1131
    %1351 = vmatprep.subr.mxu0 %v1134
    %1352 = vmatpush1.msra.mxu0 %v1133
    %1353 = vmatprep.subr.mxu0 %v1136
    %1354 = vmatpush1.msra.mxu0 %v1135
    %1355 = vmatprep.subr.mxu0 %v1138
    %1356 = vmatpush1.msra.mxu0 %v1137
    %1357 = vmatprep.subr.mxu0 %v1140
    %1358 = vmatpush1.msra.mxu0 %v1139
    %1359 = vmatprep.subr.mxu0 %v1142
    %1360 = vmatpush1.msra.mxu0 %v1141
    %1361 = vmatprep.subr.mxu0 %v1144
    %1362 = vmatpush1.msra.mxu0 %v1143
    %1363 = vmatprep.subr.mxu0 %v1146
    %1364 = vmatpush1.msra.mxu0 %v1145
    %1365 = vmatprep.subr.mxu0 %v1148
    %1366 = vmatpush1.msra.mxu0 %v1147
    %1367 = vmatprep.subr.mxu0 %v1150
    %1368 = vmatpush1.msra.mxu0 %v1149
    %1369 = vmatprep.subr.mxu0 %v1152
    %1370 = vmatpush1.msra.mxu0 %v1151
    %1371 = vmatprep.subr.mxu0 %v1154
    %1372 = vmatpush1.msra.mxu0 %v1153
    %1373 = vmatprep.subr.mxu0 %v1156
    %1374 = vmatpush1.msra.mxu0 %v1155
    %1375 = vmatprep.subr.mxu0 %v1158
    %1376 = vmatpush1.msra.mxu0 %v1157
    %1377 = vmatprep.subr.mxu0 %v1160
    %1378 = vmatpush1.msra.mxu0 %v1159
    %1379 = vmatprep.subr.mxu0 %v1162
    %1380 = vmatpush1.msra.mxu0 %v1161
    %1381 = vmatprep.subr.mxu0 %v1164
    %1382 = vmatpush1.msra.mxu0 %v1163
    %1383 = vmatprep.subr.mxu0 %v1166
    %1384 = vmatpush1.msra.mxu0 %v1165
    %1385 = vmatprep.subr.mxu0 %v1168
    %1386 = vmatpush1.msra.mxu0 %v1167
    %1387 = vmatprep.subr.mxu0 %v1170
    %1388 = vmatpush1.msra.mxu0 %v1169
    %1389 = vmatprep.subr.mxu0 %v1172
    %1390 = vmatpush1.msra.mxu0 %v1171
    %1391 = vmatprep.subr.mxu0 %v1174
    %1392 = vmatpush1.msra.mxu0 %v1173
    %1393 = vmatprep.subr.mxu0 %v1176
    %1394 = vmatpush1.msra.mxu0 %v1175
    %1395 = vmatprep.subr.mxu0 %v1178
    %1396 = vmatpush1.msra.mxu0 %v1177
    %1397 = vmatprep.subr.mxu0 %v1180
    %1398 = vmatpush1.msra.mxu0 %v1179
    %1399 = vmatprep.mubr.f32.mxu0 %v978
    %1400 = vmatmul.mubr.f32.gmra.mrb[0].mxu0 %v975
    %v1401 = vpop.f32.mrb[0].mxu0
    %v1402 = vadd.f32 %v1325, %v1401
    %v1403 = vpop.f32.mrb[0].mxu0
    %v1404 = vadd.f32 %v1327, %v1403
    %1405 = vmatprep.mubr.f32.mxu0 %v984
    %1406 = vmatmul.mubr.f32.gmra.mrb[0].mxu0 %v981
    %v1407 = vpop.f32.mrb[0].mxu0
    %v1408 = vadd.f32 %v1331, %v1407
    %v1409 = vpop.f32.mrb[0].mxu0
    %v1410 = vadd.f32 %v1333, %v1409
    %1411 = vdwg.mxu0
    %v1412 = vmul.f32 %v1402, %v1402
    %v1413 = vmul.f32 %v1404, %v1404
    %v1414 = vmul.f32 %v1408, %v1408
    %v1415 = vmul.f32 %v1410, %v1410
    %v1416 = vld [vmem:[%s7] sm:$0xff]
    %v1417 = vld [vmem:[%s7 + $0x8] sm:$0xff]
    %v1418 = vld [vmem:[%s7 + $0x10] sm:$0xff]
    %v1419 = vld [vmem:[%s7 + $0x18] sm:$0xff]
    %v1420 = vld [vmem:[%s7 + $0x20] sm:$0xff]
    %v1421 = vld [vmem:[%s7 + $0x28] sm:$0xff]
    %v1422 = vld [vmem:[%s7 + $0x30] sm:$0xff]
    %v1423 = vld [vmem:[%s7 + $0x38] sm:$0xff]
    %v1424 = vld [vmem:[%s7 + $0x40] sm:$0xff]
    %v1425 = vld [vmem:[%s7 + $0x48] sm:$0xff]
    %v1426 = vld [vmem:[%s7 + $0x50] sm:$0xff]
    %v1427 = vld [vmem:[%s7 + $0x58] sm:$0xff]
    %v1428 = vld [vmem:[%s7 + $0x60] sm:$0xff]
    %v1429 = vld [vmem:[%s7 + $0x68] sm:$0xff]
    %v1430 = vld [vmem:[%s7 + $0x70] sm:$0xff]
    %v1431 = vld [vmem:[%s7 + $0x78] sm:$0xff]
    %v1432 = vld [vmem:[%s7 + $0x80] sm:$0xff]
    %v1433 = vld [vmem:[%s7 + $0x88] sm:$0xff]
    %v1434 = vld [vmem:[%s7 + $0x90] sm:$0xff]
    %v1435 = vld [vmem:[%s7 + $0x98] sm:$0xff]
    %v1436 = vld [vmem:[%s7 + $0xa0] sm:$0xff]
    %v1437 = vld [vmem:[%s7 + $0xa8] sm:$0xff]
    %v1438 = vld [vmem:[%s7 + $0xb0] sm:$0xff]
    %v1439 = vld [vmem:[%s7 + $0xb8] sm:$0xff]
    %v1440 = vld [vmem:[%s7 + $0xc0] sm:$0xff]
    %v1441 = vld [vmem:[%s7 + $0xc8] sm:$0xff]
    %v1442 = vld [vmem:[%s7 + $0xd0] sm:$0xff]
    %v1443 = vld [vmem:[%s7 + $0xd8] sm:$0xff]
    %v1444 = vld [vmem:[%s7 + $0xe0] sm:$0xff]
    %v1445 = vld [vmem:[%s7 + $0xe8] sm:$0xff]
    %v1446 = vld [vmem:[%s7 + $0xf0] sm:$0xff]
    %v1447 = vld [vmem:[%s7 + $0xf8] sm:$0xff]
    %1448 = vmatprep.subr.mxu0 0.0
    %1449 = vmatpush1.msra.mxu0 %v1416
    %1450 = vmatprep.subr.mxu0 0.0
    %1451 = vmatpush1.msra.mxu0 %v1417
    %1452 = vmatprep.subr.mxu0 0.0
    %1453 = vmatpush1.msra.mxu0 %v1418
    %1454 = vmatprep.subr.mxu0 0.0
    %1455 = vmatpush1.msra.mxu0 %v1419
    %1456 = vmatprep.subr.mxu0 0.0
    %1457 = vmatpush1.msra.mxu0 %v1420
    %1458 = vmatprep.subr.mxu0 0.0
    %1459 = vmatpush1.msra.mxu0 %v1421
    %1460 = vmatprep.subr.mxu0 0.0
    %1461 = vmatpush1.msra.mxu0 %v1422
    %1462 = vmatprep.subr.mxu0 0.0
    %1463 = vmatpush1.msra.mxu0 %v1423
    %1464 = vmatprep.subr.mxu0 0.0
    %1465 = vmatpush1.msra.mxu0 %v1424
    %1466 = vmatprep.subr.mxu0 0.0
    %1467 = vmatpush1.msra.mxu0 %v1425
    %1468 = vmatprep.subr.mxu0 0.0
    %1469 = vmatpush1.msra.mxu0 %v1426
    %1470 = vmatprep.subr.mxu0 0.0
    %1471 = vmatpush1.msra.mxu0 %v1427
    %1472 = vmatprep.subr.mxu0 0.0
    %1473 = vmatpush1.msra.mxu0 %v1428
    %1474 = vmatprep.subr.mxu0 0.0
    %1475 = vmatpush1.msra.mxu0 %v1429
    %1476 = vmatprep.subr.mxu0 0.0
    %1477 = vmatpush1.msra.mxu0 %v1430
    %1478 = vmatprep.subr.mxu0 0.0
    %1479 = vmatpush1.msra.mxu0 %v1431
    %1480 = vmatprep.subr.mxu0 0.0
    %1481 = vmatpush1.msra.mxu0 %v1432
    %1482 = vmatprep.subr.mxu0 0.0
    %1483 = vmatpush1.msra.mxu0 %v1433
    %1484 = vmatprep.subr.mxu0 0.0
    %1485 = vmatpush1.msra.mxu0 %v1434
    %1486 = vmatprep.subr.mxu0 0.0
    %1487 = vmatpush1.msra.mxu0 %v1435
    %1488 = vmatprep.subr.mxu0 0.0
    %1489 = vmatpush1.msra.mxu0 %v1436
    %1490 = vmatprep.subr.mxu0 0.0
    %1491 = vmatpush1.msra.mxu0 %v1437
    %1492 = vmatprep.subr.mxu0 0.0
    %1493 = vmatpush1.msra.mxu0 %v1438
    %1494 = vmatprep.subr.mxu0 0.0
    %1495 = vmatpush1.msra.mxu0 %v1439
    %1496 = vmatprep.subr.mxu0 0.0
    %1497 = vmatpush1.msra.mxu0 %v1440
    %1498 = vmatprep.subr.mxu0 0.0
    %1499 = vmatpush1.msra.mxu0 %v1441
    %1500 = vmatprep.subr.mxu0 0.0
    %1501 = vmatpush1.msra.mxu0 %v1442
    %1502 = vmatprep.subr.mxu0 0.0
    %1503 = vmatpush1.msra.mxu0 %v1443
    %1504 = vmatprep.subr.mxu0 0.0
    %1505 = vmatpush1.msra.mxu0 %v1444
    %1506 = vmatprep.subr.mxu0 0.0
    %1507 = vmatpush1.msra.mxu0 %v1445
    %1508 = vmatprep.subr.mxu0 0.0
    %1509 = vmatpush1.msra.mxu0 %v1446
    %1510 = vmatprep.subr.mxu0 0.0
    %1511 = vmatpush1.msra.mxu0 %v1447
    %1512 = vmatprep.mubr.f32.mxu0 %v1404
    %1513 = vmatmul.mubr.f32.gmra.mrb[0].mxu0 %v1402
    %v1514 = vpop.f32.mrb[0].mxu0
    %v1515 = vadd.f32 0.0, %v1514
    %v1516 = vpop.f32.mrb[0].mxu0
    %1517 = vmatprep.mubr.f32.mxu0 %v1410
    %1518 = vmatmul.mubr.f32.gmra.mrb[0].mxu0 %v1408
    %v1519 = vpop.f32.mrb[0].mxu0
    %v1520 = vadd.f32 0.0, %v1519
    %v1521 = vpop.f32.mrb[0].mxu0
    %1522 = vmatprep.mubr.f32.mxu0 %v1413
    %1523 = vmatmul.mubr.f32.gmra.mrb[0].mxu0 %v1412
    %v1524 = vpop.f32.mrb[0].mxu0
    %v1525 = vadd.f32 0.0, %v1524
    %v1526 = vpop.f32.mrb[0].mxu0
    %1527 = vmatprep.mubr.f32.mxu0 %v1415
    %1528 = vmatmul.mubr.f32.gmra.mrb[0].mxu0 %v1414
    %v1529 = vpop.f32.mrb[0].mxu0
    %v1530 = vadd.f32 0.0, %v1529
    %v1531 = vpop.f32.mrb[0].mxu0
    %1532 = vdwg.mxu0
    %v1533 = vsel %vm714, %v1515, 0.0
    %v1534 = vsel %vm714, %v1520, 0.0
    %v1535 = vadd.f32 %v1533, %v1534
    %v1536 = vrot.slane %v1535, 4
    %v1537 = vadd.f32 %v1535, %v1536
    %v1538 = vrot.slane %v1537, 2
    %v1539 = vadd.f32 %v1537, %v1538
    %v1540 = vrot.slane %v1539, 1
    %v1541 = vadd.f32 %v1539, %v1540
    %v1542 = vsel %vm714, %v1525, 0.0
    %v1543 = vsel %vm714, %v1530, 0.0
    %v1544 = vadd.f32 %v1542, %v1543
    %v1545 = vrot.slane %v1544, 4
    %v1546 = vadd.f32 %v1544, %v1545
    %v1547 = vrot.slane %v1546, 2
    %v1548 = vadd.f32 %v1546, %v1547
    %v1549 = vrot.slane %v1548, 1
    %v1550 = vadd.f32 %v1548, %v1549
    %v1551 = vmul.f32 %v1541, 0.0078125
    %v1552 = vmul.f32 %v1550, 0.0078125
    %v1553 = vmul.f32 %v1551, %v1551
    %v1554 = vsub.f32 %v1552, %v1553
    %v1555 = vadd.f32 %v1554, 1e-05
    %v1556 = vrsqrt.pop %v1555
    %v1557 = vsel %vm739, %v1556, %v1551
    %v1558 = vld [vmem:[%s8] sm:$0xff]
    %v1559 = vld [vmem:[%s8 + $0x8] sm:$0xff]
    %v1560 = vld [vmem:[%s8 + $0x10] sm:$0xff]
    %v1561 = vld [vmem:[%s8 + $0x18] sm:$0xff]
    %v1562 = vld [vmem:[%s8 + $0x20] sm:$0xff]
    %v1563 = vld [vmem:[%s8 + $0x28] sm:$0xff]
    %v1564 = vld [vmem:[%s8 + $0x30] sm:$0xff]
    %v1565 = vld [vmem:[%s8 + $0x38] sm:$0xff]
    %v1567 = vsel %vm714, %v1557, 0
    %1569 = vmatprep.subr.mxu0 %v1559
    %1570 = vmatpush1.msra.mxu0 %v1558
    %1571 = vmatprep.subr.mxu0 %v1561
    %1572 = vmatpush1.msra.mxu0 %v1560
    %1573 = vmatprep.subr.mxu0 %v1563
    %1574 = vmatpush1.msra.mxu0 %v1562
    %1575 = vmatprep.subr.mxu0 %v1565
    %1576 = vmatpush1.msra.mxu0 %v1564
    %1577 = vmatprep.subr.mxu0 0.0
    %1578 = vmatpush1.msra.mxu0 0.0
    %1579 = vmatprep.subr.mxu0 0.0
    %1580 = vmatpush1.msra.mxu0 0.0
    %1581 = vmatprep.subr.mxu0 0.0
    %1582 = vmatpush1.msra.mxu0 0.0
    %1583 = vmatprep.subr.mxu0 0.0
    %1584 = vmatpush1.msra.mxu0 0.0
    %1585 = vmatprep.subr.mxu0 0.0
    %1586 = vmatpush1.msra.mxu0 0.0
    %1587 = vmatprep.subr.mxu0 0.0
    %1588 = vmatpush1.msra.mxu0 0.0
    %1589 = vmatprep.subr.mxu0 0.0
    %1590 = vmatpush1.msra.mxu0 0.0
    %1591 = vmatprep.subr.mxu0 0.0
    %1592 = vmatpush1.msra.mxu0 0.0
    %1593 = vmatprep.subr.mxu0 0.0
    %1594 = vmatpush1.msra.mxu0 0.0
    %1595 = vmatprep.subr.mxu0 0.0
    %1596 = vmatpush1.msra.mxu0 0.0
    %1597 = vmatprep.subr.mxu0 0.0
    %1598 = vmatpush1.msra.mxu0 0.0
    %1599 = vmatprep.subr.mxu0 0.0
    %1600 = vmatpush1.msra.mxu0 0.0
    %1601 = vmatprep.subr.mxu0 0.0
    %1602 = vmatpush1.msra.mxu0 0.0
    %1603 = vmatprep.subr.mxu0 0.0
    %1604 = vmatpush1.msra.mxu0 0.0
    %1605 = vmatprep.subr.mxu0 0.0
    %1606 = vmatpush1.msra.mxu0 0.0
    %1607 = vmatprep.subr.mxu0 0.0
    %1608 = vmatpush1.msra.mxu0 0.0
    %1609 = vmatprep.subr.mxu0 0.0
    %1610 = vmatpush1.msra.mxu0 0.0
    %1611 = vmatprep.subr.mxu0 0.0
    %1612 = vmatpush1.msra.mxu0 0.0
    %1613 = vmatprep.subr.mxu0 0.0
    %1614 = vmatpush1.msra.mxu0 0.0
    %1615 = vmatprep.subr.mxu0 0.0
    %1616 = vmatpush1.msra.mxu0 0.0
    %1617 = vmatprep.subr.mxu0 0.0
    %1618 = vmatpush1.msra.mxu0 0.0
    %1619 = vmatprep.subr.mxu0 0.0
    %1620 = vmatpush1.msra.mxu0 0.0
    %1621 = vmatprep.subr.mxu0 0.0
    %1622 = vmatpush1.msra.mxu0 0.0
    %1623 = vmatprep.subr.mxu0 0.0
    %1624 = vmatpush1.msra.mxu0 0.0
    %1625 = vmatprep.subr.mxu0 0.0
    %1626 = vmatpush1.msra.mxu0 0.0
    %1627 = vmatprep.subr.mxu0 0.0
    %1628 = vmatpush1.msra.mxu0 0.0
    %1629 = vmatprep.subr.mxu0 0.0
    %1630 = vmatpush1.msra.mxu0 0.0
    %1631 = vmatprep.subr.mxu0 0.0
    %1632 = vmatpush1.msra.mxu0 0.0
    %1633 = vmatprep.mubr.f32.mxu0 0.0
    %1634 = vmatmul.mubr.f32.gmra.mrb[0].mxu0 %v1567
    %v1635 = vpop.f32.mrb[0].mxu0
    %v1636 = vadd.f32 0.0, %v1635
    %v1637 = vpop.f32.mrb[0].mxu0
    %v1638 = vadd.f32 0.0, %v1637
    %1639 = vdwg.mxu0
    %v1640 = vld [vmem:[%s5] sm:$0x3]
    %v1642 = vlaneseq
    %v1643 = vshrl.u32 %v1642, 7
    %v1644 = vsub.s32 0, %v1643
    %v1645 = vrot.slane %v1640, %v1644
    %v1646 = vlaneseq
    %v1647 = vshrl.u32 %v1646, 7
    %v1648 = vsub.s32 1, %v1647
    %v1649 = vrot.slane %v1640, %v1648
    %v1652 = vmul.f32 %v1636, %v1645
    %v1653 = vmul.f32 %v1638, %v1649
    %v1654 = vld [vmem:[%s6] sm:$0x3]
    %v1657 = vrot.slane %v1652, 7
    %v1658 = vrot.slane %v1653, 7
    %v1661 = vmul.f32 %v1636, %v1657
    %v1662 = vmul.f32 %v1638, %v1658
    %v1665 = vcombine.low %v1661, %v1662
    %v1667 = vunpack.c.l.s4 1966171168
    %v1668 = vunpack.c.0.s8 %v1667
    %v1669 = vlaneseq
    %v1670 = vshrl.u32 %v1669, 7
    %v1671 = vsub.s32 %v1668, %v1670
    %v1672 = vrot.slane %v1665, %v1671
    %v1673 = vcombine.high %v1672, %v1672
    %v1675 = vunpack.c.l.s4 1966171168
    %v1676 = vunpack.c.0.s8 %v1675
    %v1677 = vlaneseq
    %v1678 = vshrl.u32 %v1677, 7
    %v1679 = vsub.s32 %v1676, %v1678
    %v1680 = vrot.slane %v1673, %v1679
    %v1682 = vsub.f32 %v1654, %v1680
    %v1683 = vlaneseq
    %v1684 = vshrl.u32 %v1683, 7
    %v1685 = vsub.s32 0, %v1684
    %v1686 = vrot.slane %v1652, %v1685
    %v1687 = vlaneseq
    %v1688 = vshrl.u32 %v1687, 7
    %v1689 = vsub.s32 0, %v1688
    %v1690 = vrot.slane %v1653, %v1689
    %v1691 = vmul.f32 %v1402, %v1686
    %v1692 = vmul.f32 %v1404, %v1690
    %v1693 = vmul.f32 %v1408, %v1686
    %v1694 = vmul.f32 %v1410, %v1690
    %v1696 = vlaneseq
    %v1697 = vshrl.u32 %v1696, 7
    %v1698 = vsub.s32 0, %v1697
    %v1699 = vrot.slane %v1682, %v1698
    %v1700 = vlaneseq
    %v1701 = vshrl.u32 %v1700, 7
    %v1702 = vsub.s32 1, %v1701
    %v1703 = vrot.slane %v1682, %v1702
    %v1706 = vadd.f32 %v1691, %v1699
    %v1707 = vadd.f32 %v1692, %v1703
    %v1708 = vadd.f32 %v1693, %v1699
    %v1709 = vadd.f32 %v1694, %v1703
    %v1710 = vadd.f32 %v1706, %v897
    %v1711 = vadd.f32 %v1707, %v898
    %v1712 = vadd.f32 %v1708, %v899
    %v1713 = vadd.f32 %v1709, %v900
    %v1714 = vmax.f32 %v1710, 0.0
    %v1715 = vmax.f32 %v1711, 0.0
    %v1716 = vmax.f32 %v1712, 0.0
    %v1717 = vmax.f32 %v1713, 0.0
    %1718 = vst [vmem:[#allocation8] sm:$0xff] %v1714
    %1719 = vst [vmem:[#allocation8 + $0x8] sm:$0xff] %v1715
    %1720 = vst [vmem:[#allocation8 + $0x10] sm:$0xff] %v1716
    %1721 = vst [vmem:[#allocation8 + $0x18] sm:$0xff] %v1717
    // Predicated region
    $region46: #{tpu_custom_call.1} parent=1 // pred_check
      _
    $region47: #{tpu_custom_call.1} parent=1 // pred_check_branch
      %1723 = sbr.rel (0) target = $region49
    $region48: #{tpu_custom_call.1} parent=1 // pred_region
      %s1725 = ssub.s32 512, 512
      %1726 = vsyncadd [#allocation5], %s1725
      %s1727 = sshll.u32 [#allocation8], 4
      %s1728 = int_to_ptr.vmem [resolvable:$true] %s1727
      %1733 = dma.vmem_to_hbm [thread:$0]  %s1728, 512, %s9, [#allocation5], 256, 256, 16
    $region49: #{tpu_custom_call.1} parent=1 // pred_fallthru
      _
    // Predicated region
    $region50: #{tpu_custom_call.1} parent=1 // pred_check
      _
    $region51: #{tpu_custom_call.1} parent=1 // pred_check_branch
      %1735 = sbr.rel (0) target = $region53
    $region52: #{tpu_custom_call.1} parent=1 // pred_region
      %1736 = dma.done [#allocation5], 512
    $region53: #{tpu_custom_call.1} parent=1 // pred_fallthru
      _
    %1737 = vsyncpa [#allocation4], 1
    %1738 = vsyncpa [#allocation7], 1
    %1739 = vsyncpa [#allocation5], 1

</llo_original>
